<compile_context>
chip_gen: v5e
topology: v5e:2x2
jax: 0.10.0
libtpu: 0.0.40
codegen_flags: <defaults>
</compile_context>

<pallas_src>
import functools

import jax
import jax.numpy as jnp
from jax.experimental import pallas as pl
from jax.experimental.pallas import tpu as pltpu


PARAM_ORDER = ('wq', 'bq', 'wk', 'bk', 'wv', 'bv', 'wo', 'bo',
               'g1', 'be1', 'w1', 'b1', 'w2', 'b2', 'g2', 'be2')


# ----------------------------------------------------------------------------
# Pallas kernel: one encoder layer for a block of `block_b` batch elements.
# ----------------------------------------------------------------------------
def encoder_layer_kernel(
    x_ref, mask_ref,
    wq_ref, bq_ref, wk_ref, bk_ref, wv_ref, bv_ref, wo_ref, bo_ref,
    g1_ref, be1_ref,
    w1_ref, b1_ref, w2_ref, b2_ref,
    g2_ref, be2_ref,
    o_ref,
    ctx_ref,                 # VMEM scratch (block_b, S, D) for head contexts
    *, n_head: int,
):
    TB, S, D = x_ref.shape
    dh = D // n_head
    scale = 1.0 / float(dh) ** 0.5

    x3 = x_ref[...]                       # (TB, S, D)
    x = x3.reshape(TB * S, D)             # leading-dim merge: no lane movement

    def linear(v, w_ref, b_ref):
        # TODO(synk): for bf16 weights/activations (2x MXU throughput, half the
        # weight DMA / VMEM) cast v and w_ref[...] here, keep f32 accumulation;
        # LayerNorm / softmax below must stay in f32 (esp. on v5e).
        return jnp.dot(v, w_ref[...],
                       preferred_element_type=jnp.float32) + b_ref[...]

    def layer_norm(v, g_ref, b_ref):
        mean = v.mean(axis=-1, keepdims=True)
        var = ((v - mean) ** 2).mean(axis=-1, keepdims=True)   # biased variance
        return g_ref[...] * (v - mean) / jnp.sqrt(var + 1e-12) + b_ref[...]

    # ---- Q/K/V projections on the flattened (TB*S, D) block ----
    q = linear(x, wq_ref, bq_ref) * scale     # fold 1/sqrt(dh) into Q once
    k = linear(x, wk_ref, bk_ref)
    v = linear(x, wv_ref, bv_ref)

    q3 = q.reshape(TB, S, D)
    k3 = k.reshape(TB, S, D)
    v3 = v.reshape(TB, S, D)

    # Key-padding mask, computed once per grid step: (TB, 1, S); True == pad.
    is_pad = mask_ref[...] == 0.0

    # ---- per-head attention, batched over the TB sequences of this block ----
    for h in range(n_head):                   # static unroll; no concatenate
        sl = slice(h * dh, (h + 1) * dh)
        qh, kh, vh = q3[:, :, sl], k3[:, :, sl], v3[:, :, sl]   # (TB, S, dh)
        s = jnp.einsum('bqd,bkd->bqk', qh, kh,
                       preferred_element_type=jnp.float32)      # (TB, S, S)
        # masked_fill semantics (exactly -10000), broadcast over the query axis
        s = jnp.where(is_pad, jnp.float32(-10000.0), s)
        s = s - s.max(axis=-1, keepdims=True)
        p = jnp.exp(s)
        # approx=True would move this fully onto the EUP; kept exact so the
        # 2e-4 correctness check below stays tight.
        inv = pl.reciprocal(p.sum(axis=-1, keepdims=True), approx=False)
        p = p * inv
        # write this head's context straight into scratch at its column offset
        ctx_ref[:, :, sl] = jnp.einsum('bqk,bkd->bqd', p, vh,
                                       preferred_element_type=jnp.float32)

    ctx = ctx_ref[...].reshape(TB * S, D)
    attn_out = linear(ctx, wo_ref, bo_ref)

    # ---- residual + LayerNorm 1 ----
    x1 = layer_norm(x + attn_out, g1_ref, be1_ref)

    # ---- position-wise feed-forward ----
    hid = jnp.maximum(linear(x1, w1_ref, b1_ref), 0.0)
    ffn_out = linear(hid, w2_ref, b2_ref)

    # ---- residual + LayerNorm 2 ----
    y = layer_norm(x1 + ffn_out, g2_ref, be2_ref)
    o_ref[...] = y.reshape(TB, S, D)          # D % 128 == 0 -> full-lane stores


# ----------------------------------------------------------------------------
# Wrapper: pallas_call with batch-blocked grid.
# ----------------------------------------------------------------------------
def _choose_block_b(B, S, row_target=128):
    """Pick block_b so the linears see ~row_target MXU rows, while keeping the
    parallel grid extent >= 2 when possible (both v7x TensorCores busy)."""
    tb = max(1, min(B, row_target // max(S, 1)))
    if B >= 2:
        tb = min(tb, max(1, B // 2))
    while B % tb != 0:
        tb -= 1
    return tb


def encoder_layer_pallas(x, key_mask, params, *, n_head, block_b=None):
    """x: (B,S,D) f32; key_mask: (B,1,S) f32 where 0.0 marks a padded key."""
    B, S, D = x.shape
    if block_b is None:
        block_b = _choose_block_b(B, S)
    assert B % block_b == 0
    weight_args = [params[name] for name in PARAM_ORDER]

    def full_spec(arr):
        # Grid-invariant weight blocks (index_map constant across the grid).
        # TODO(synk): on v7x (64 MiB VMEM) with realistic d_model/ffn_hidden,
        # use pipeline_mode=pl.Buffered(1) here, tile ffn_hidden on an extra
        # grid axis, and set vmem_limit_bytes explicitly.
        n = arr.ndim
        return pl.BlockSpec(arr.shape, lambda b, _n=n: (0,) * _n)

    in_specs = (
        [pl.BlockSpec((block_b, S, D), lambda b: (b, 0, 0)),
         pl.BlockSpec((block_b, 1, S), lambda b: (b, 0, 0))]
        + [full_spec(a) for a in weight_args]
    )
    out_spec = pl.BlockSpec((block_b, S, D), lambda b: (b, 0, 0))

    kernel = functools.partial(encoder_layer_kernel, n_head=n_head)
    return pl.pallas_call(
        kernel,
        out_shape=jax.ShapeDtypeStruct((B, S, D), jnp.float32),
        grid=(B // block_b,),
        in_specs=in_specs,
        out_specs=out_spec,
        scratch_shapes=[pltpu.VMEM((block_b, S, D), jnp.float32)],
        compiler_params=pltpu.CompilerParams(
            dimension_semantics=("parallel",)),
    )(x, key_mask, *weight_args)


# ----------------------------------------------------------------------------
# Plain-JAX glue: embedding + positional encoding; full encoder stack.
# ----------------------------------------------------------------------------
def sinusoidal_encoding(max_len, d_model):
    pos = jnp.arange(max_len, dtype=jnp.float32)[:, None]
    i2 = jnp.arange(0, d_model, 2, dtype=jnp.float32)
    angle = pos / jnp.power(10000.0, i2 / d_model)
    pe = jnp.zeros((max_len, d_model), dtype=jnp.float32)
    pe = pe.at[:, 0::2].set(jnp.sin(angle))
    pe = pe.at[:, 1::2].set(jnp.cos(angle))
    return pe


def encoder_single_forward(tokens, src_mask, emb_table, pe, layer_params,
                           *, n_head, block_b=None):
    """tokens: (B,S) int32; src_mask: (B,1,1,S) bool."""
    B, S = tokens.shape
    # TransformerEmbedding: tok_emb + pos_emb (dropout == identity in eval)
    x = emb_table[tokens] + pe[None, :S, :]                    # (B, S, D)
    key_mask = src_mask[:, 0, :, :].astype(jnp.float32)        # (B, 1, S)
    for p in layer_params:
        x = encoder_layer_pallas(x, key_mask, p, n_head=n_head,
                                 block_b=block_b)
    return x


# ----------------------------------------------------------------------------
# Pure-JAX reference (same math as the PyTorch module) for correctness check.
# ----------------------------------------------------------------------------
def ref_encoder_layer(x, src_mask, p, n_head):
    B, S, D = x.shape
    dh = D // n_head
    hp = jax.lax.Precision.HIGHEST

    def linear(v, w, b):
        return jnp.dot(v, w, precision=hp) + b

    def ln(v, g, b):
        m = v.mean(-1, keepdims=True)
        var = ((v - m) ** 2).mean(-1, keepdims=True)
        return g * (v - m) / jnp.sqrt(var + 1e-12) + b

    q = linear(x, p['wq'], p['bq']).reshape(B, S, n_head, dh).transpose(0, 2, 1, 3)
    k = linear(x, p['wk'], p['bk']).reshape(B, S, n_head, dh).transpose(0, 2, 1, 3)
    v = linear(x, p['wv'], p['bv']).reshape(B, S, n_head, dh).transpose(0, 2, 1, 3)
    s = jnp.einsum('bhsd,bhtd->bhst', q, k, precision=hp) / jnp.sqrt(jnp.float32(dh))
    s = jnp.where(src_mask == 0, -10000.0, s)          # (B,1,1,S) broadcast
    a = jax.nn.softmax(s, axis=-1)
    ctx = jnp.einsum('bhst,bhtd->bhsd', a, v,
                     precision=hp).transpose(0, 2, 1, 3).reshape(B, S, D)
    attn = linear(ctx, p['wo'], p['bo'])
    x1 = ln(x + attn, p['g1'], p['be1'])
    h = jnp.maximum(linear(x1, p['w1'], p['b1']), 0.0)
    x2 = ln(x1 + linear(h, p['w2'], p['b2']), p['g2'], p['be2'])
    return x2


def ref_encoder(tokens, src_mask, emb_table, pe, layer_params, n_head):
    B, S = tokens.shape
    x = emb_table[tokens] + pe[None, :S, :]
    for p in layer_params:
        x = ref_encoder_layer(x, src_mask, p, n_head)
    return x


# ----------------------------------------------------------------------------
# Deterministic parameter init.
# ----------------------------------------------------------------------------
def init_layer_params(key, d_model, ffn_hidden, scale=0.05):
    ks = jax.random.split(key, 6)
    return dict(
        wq=jax.random.normal(ks[0], (d_model, d_model), jnp.float32) * scale,
        bq=jnp.zeros((1, d_model), jnp.float32),
        wk=jax.random.normal(ks[1], (d_model, d_model), jnp.float32) * scale,
        bk=jnp.zeros((1, d_model), jnp.float32),
        wv=jax.random.normal(ks[2], (d_model, d_model), jnp.float32) * scale,
        bv=jnp.zeros((1, d_model), jnp.float32),
        wo=jax.random.normal(ks[3], (d_model, d_model), jnp.float32) * scale,
        bo=jnp.zeros((1, d_model), jnp.float32),
        g1=jnp.ones((1, d_model), jnp.float32),
        be1=jnp.zeros((1, d_model), jnp.float32),
        w1=jax.random.normal(ks[4], (d_model, ffn_hidden), jnp.float32) * scale,
        b1=jnp.zeros((1, ffn_hidden), jnp.float32),
        w2=jax.random.normal(ks[5], (ffn_hidden, d_model), jnp.float32) * scale,
        b2=jnp.zeros((1, d_model), jnp.float32),
        g2=jnp.ones((1, d_model), jnp.float32),
        be2=jnp.zeros((1, d_model), jnp.float32),
    )


if __name__ == "__main__":
    # Small, forward-consistent shapes.  d_model is a multiple of 128 so the
    # kernel's output stores are full-lane (unmasked vst).
    B, S = 4, 8
    enc_voc_size, max_len = 50, 16
    d_model, ffn_hidden, n_head, n_layers = 128, 256, 4, 2
    PAD_IDX = 1  # nn.Embedding(padding_idx=1)

    key = jax.random.PRNGKey(0)
    k_tok, k_emb, k_layers = jax.random.split(key, 3)

    tokens = jax.random.randint(k_tok, (B, S), 0, enc_voc_size, dtype=jnp.int32)
    tokens = tokens.at[0, -2:].set(PAD_IDX)   # some padding so the mask matters
    tokens = tokens.at[2, -3:].set(PAD_IDX)
    src_mask = (tokens != PAD_IDX)[:, None, None, :]   # (B,1,1,S) bool

    emb_table = jax.random.normal(k_emb, (enc_voc_size, d_model), jnp.float32) * 0.1
    emb_table = emb_table.at[PAD_IDX].set(0.0)          # padding_idx row = 0
    pe = sinusoidal_encoding(max_len, d_model)

    layer_params = [
        init_layer_params(k, d_model, ffn_hidden)
        for k in jax.random.split(k_layers, n_layers)
    ]

    out = encoder_single_forward(tokens, src_mask, emb_table, pe,
                                 layer_params, n_head=n_head)
    out = jax.block_until_ready(out)

    ref = ref_encoder(tokens, src_mask, emb_table, pe, layer_params, n_head)
    assert out.shape == (B, S, d_model)
    assert jnp.allclose(out, ref, rtol=2e-4, atol=2e-4), "mismatch vs reference"

    # TODO(synk): dropout is stochastic and has no deterministic Pallas
    # equivalent; it is treated as identity (eval mode).
    print("KERNEL_OK")
</pallas_src>

<mosaic_0001>
module attributes {stable_mosaic.version = 11 : i64} {
  func.func @encoder_layer_kernel(%arg0: i32, %arg1: memref<2x8x128xf32, #tpu.memory_space<vmem>>, %arg2: memref<2x1x8xf32, #tpu.memory_space<vmem>>, %arg3: memref<128x128xf32, #tpu.memory_space<vmem>>, %arg4: memref<1x128xf32, #tpu.memory_space<vmem>>, %arg5: memref<128x128xf32, #tpu.memory_space<vmem>>, %arg6: memref<1x128xf32, #tpu.memory_space<vmem>>, %arg7: memref<128x128xf32, #tpu.memory_space<vmem>>, %arg8: memref<1x128xf32, #tpu.memory_space<vmem>>, %arg9: memref<128x128xf32, #tpu.memory_space<vmem>>, %arg10: memref<1x128xf32, #tpu.memory_space<vmem>>, %arg11: memref<1x128xf32, #tpu.memory_space<vmem>>, %arg12: memref<1x128xf32, #tpu.memory_space<vmem>>, %arg13: memref<128x256xf32, #tpu.memory_space<vmem>>, %arg14: memref<1x256xf32, #tpu.memory_space<vmem>>, %arg15: memref<256x128xf32, #tpu.memory_space<vmem>>, %arg16: memref<1x128xf32, #tpu.memory_space<vmem>>, %arg17: memref<1x128xf32, #tpu.memory_space<vmem>>, %arg18: memref<1x128xf32, #tpu.memory_space<vmem>>, %arg19: memref<2x8x128xf32, #tpu.memory_space<vmem>>, %arg20: memref<2x8x128xf32, #tpu.memory_space<vmem>>) attributes {dimension_semantics = [#tpu.dimension_semantics<parallel>], iteration_bounds = array<i64: 2>, scalar_prefetch = 0 : i64, scratch_operands = 1 : i64, tpu.core_type = #tpu.core_type<tc>, window_params = [{transform_indices = @transform_0, window_bounds = array<i64: 2, 8, 128>}, {transform_indices = @transform_1, window_bounds = array<i64: 2, 1, 8>}, {pipeline_mode = #tpu.pipeline_mode<synchronous>, transform_indices = @transform_2, window_bounds = array<i64: 128, 128>}, {pipeline_mode = #tpu.pipeline_mode<synchronous>, transform_indices = @transform_3, window_bounds = array<i64: 1, 128>}, {pipeline_mode = #tpu.pipeline_mode<synchronous>, transform_indices = @transform_4, window_bounds = array<i64: 128, 128>}, {pipeline_mode = #tpu.pipeline_mode<synchronous>, transform_indices = @transform_5, window_bounds = array<i64: 1, 128>}, {pipeline_mode = #tpu.pipeline_mode<synchronous>, transform_indices = @transform_6, window_bounds = array<i64: 128, 128>}, {pipeline_mode = #tpu.pipeline_mode<synchronous>, transform_indices = @transform_7, window_bounds = array<i64: 1, 128>}, {pipeline_mode = #tpu.pipeline_mode<synchronous>, transform_indices = @transform_8, window_bounds = array<i64: 128, 128>}, {pipeline_mode = #tpu.pipeline_mode<synchronous>, transform_indices = @transform_9, window_bounds = array<i64: 1, 128>}, {pipeline_mode = #tpu.pipeline_mode<synchronous>, transform_indices = @transform_10, window_bounds = array<i64: 1, 128>}, {pipeline_mode = #tpu.pipeline_mode<synchronous>, transform_indices = @transform_11, window_bounds = array<i64: 1, 128>}, {pipeline_mode = #tpu.pipeline_mode<synchronous>, transform_indices = @transform_12, window_bounds = array<i64: 128, 256>}, {pipeline_mode = #tpu.pipeline_mode<synchronous>, transform_indices = @transform_13, window_bounds = array<i64: 1, 256>}, {pipeline_mode = #tpu.pipeline_mode<synchronous>, transform_indices = @transform_14, window_bounds = array<i64: 256, 128>}, {pipeline_mode = #tpu.pipeline_mode<synchronous>, transform_indices = @transform_15, window_bounds = array<i64: 1, 128>}, {pipeline_mode = #tpu.pipeline_mode<synchronous>, transform_indices = @transform_16, window_bounds = array<i64: 1, 128>}, {pipeline_mode = #tpu.pipeline_mode<synchronous>, transform_indices = @transform_17, window_bounds = array<i64: 1, 128>}, {transform_indices = @transform_18, window_bounds = array<i64: 2, 8, 128>}]} {
    %c0 = arith.constant 0 : index
    %c0_0 = arith.constant 0 : index
    %c0_1 = arith.constant 0 : index
    %0 = vector.load %arg1[%c0, %c0_0, %c0_1] : memref<2x8x128xf32, #tpu.memory_space<vmem>>, vector<2x8x128xf32>
    %1 = vector.shape_cast %0 : vector<2x8x128xf32> to vector<16x128xf32>
    %c0_2 = arith.constant 0 : index
    %c0_3 = arith.constant 0 : index
    %2 = vector.load %arg3[%c0_2, %c0_3] : memref<128x128xf32, #tpu.memory_space<vmem>>, vector<128x128xf32>
    %cst = arith.constant dense<0.000000e+00> : vector<16x128xf32>
    %3 = tpu.matmul %1, %2, %cst {dimension_numbers = #tpu.dot_dimension_numbers<[1], [0], [0], [1], [0, 0, 1, 1], [], []>} : vector<16x128xf32>, vector<128x128xf32>, vector<16x128xf32> -> vector<16x128xf32>
    %c0_4 = arith.constant 0 : index
    %c0_5 = arith.constant 0 : index
    %4 = vector.load %arg4[%c0_4, %c0_5] : memref<1x128xf32, #tpu.memory_space<vmem>>, vector<1x128xf32>
    %5 = vector.broadcast %4 : vector<1x128xf32> to vector<16x128xf32>
    %6 = arith.addf %3, %5 : vector<16x128xf32>
    %cst_6 = arith.constant 0.176776692 : f32
    %7 = vector.broadcast %cst_6 : f32 to vector<16x128xf32>
    %8 = arith.mulf %6, %7 : vector<16x128xf32>
    %c0_7 = arith.constant 0 : index
    %c0_8 = arith.constant 0 : index
    %9 = vector.load %arg5[%c0_7, %c0_8] : memref<128x128xf32, #tpu.memory_space<vmem>>, vector<128x128xf32>
    %cst_9 = arith.constant dense<0.000000e+00> : vector<16x128xf32>
    %10 = tpu.matmul %1, %9, %cst_9 {dimension_numbers = #tpu.dot_dimension_numbers<[1], [0], [0], [1], [0, 0, 1, 1], [], []>} : vector<16x128xf32>, vector<128x128xf32>, vector<16x128xf32> -> vector<16x128xf32>
    %c0_10 = arith.constant 0 : index
    %c0_11 = arith.constant 0 : index
    %11 = vector.load %arg6[%c0_10, %c0_11] : memref<1x128xf32, #tpu.memory_space<vmem>>, vector<1x128xf32>
    %12 = vector.broadcast %11 : vector<1x128xf32> to vector<16x128xf32>
    %13 = arith.addf %10, %12 : vector<16x128xf32>
    %c0_12 = arith.constant 0 : index
    %c0_13 = arith.constant 0 : index
    %14 = vector.load %arg7[%c0_12, %c0_13] : memref<128x128xf32, #tpu.memory_space<vmem>>, vector<128x128xf32>
    %cst_14 = arith.constant dense<0.000000e+00> : vector<16x128xf32>
    %15 = tpu.matmul %1, %14, %cst_14 {dimension_numbers = #tpu.dot_dimension_numbers<[1], [0], [0], [1], [0, 0, 1, 1], [], []>} : vector<16x128xf32>, vector<128x128xf32>, vector<16x128xf32> -> vector<16x128xf32>
    %c0_15 = arith.constant 0 : index
    %c0_16 = arith.constant 0 : index
    %16 = vector.load %arg8[%c0_15, %c0_16] : memref<1x128xf32, #tpu.memory_space<vmem>>, vector<1x128xf32>
    %17 = vector.broadcast %16 : vector<1x128xf32> to vector<16x128xf32>
    %18 = arith.addf %15, %17 : vector<16x128xf32>
    %19 = vector.shape_cast %8 : vector<16x128xf32> to vector<2x8x128xf32>
    %20 = vector.shape_cast %13 : vector<16x128xf32> to vector<2x8x128xf32>
    %21 = vector.shape_cast %18 : vector<16x128xf32> to vector<2x8x128xf32>
    %c0_17 = arith.constant 0 : index
    %c0_18 = arith.constant 0 : index
    %c0_19 = arith.constant 0 : index
    %22 = vector.load %arg2[%c0_17, %c0_18, %c0_19] : memref<2x1x8xf32, #tpu.memory_space<vmem>>, vector<2x1x8xf32>
    %cst_20 = arith.constant 0.000000e+00 : f32
    %23 = vector.broadcast %cst_20 : f32 to vector<2x1x8xf32>
    %24 = arith.cmpf oeq, %22, %23 : vector<2x1x8xf32>
    %25 = vector.extract_strided_slice %19 {offsets = [0, 0, 0], sizes = [2, 8, 32], strides = [1, 1, 1]} : vector<2x8x128xf32> to vector<2x8x32xf32>
    %26 = vector.extract_strided_slice %20 {offsets = [0, 0, 0], sizes = [2, 8, 32], strides = [1, 1, 1]} : vector<2x8x128xf32> to vector<2x8x32xf32>
    %27 = vector.extract_strided_slice %21 {offsets = [0, 0, 0], sizes = [2, 8, 32], strides = [1, 1, 1]} : vector<2x8x128xf32> to vector<2x8x32xf32>
    "tpu.trace_start"() <{level = 10 : i32, message = "bqd,bkd->bqk"}> : () -> ()
    %cst_21 = arith.constant dense<0.000000e+00> : vector<2x8x8xf32>
    %28 = tpu.matmul %25, %26, %cst_21 {dimension_numbers = #tpu.dot_dimension_numbers<[2], [2], [1], [1], [0, 0, 0, 1, 1, 1], [0], [0]>} : vector<2x8x32xf32>, vector<2x8x32xf32>, vector<2x8x8xf32> -> vector<2x8x8xf32>
    %cst_22 = arith.constant -1.000000e+04 : f32
    "tpu.trace_stop"() : () -> ()
    %29 = vector.shape_cast %24 : vector<2x1x8xi1> to vector<2x1x8xi1>
    %30 = vector.broadcast %29 : vector<2x1x8xi1> to vector<2x8x8xi1>
    %31 = vector.broadcast %cst_22 : f32 to vector<2x8x8xf32>
    %32 = arith.select %30, %31, %28 : vector<2x8x8xi1>, vector<2x8x8xf32>
    %cst_23 = arith.constant dense<0xFF800000> : vector<2x8xf32>
    %33 = vector.multi_reduction <maximumf>, %32, %cst_23 [2] : vector<2x8x8xf32> to vector<2x8xf32>
    %34 = vector.shape_cast %33 : vector<2x8xf32> to vector<2x8x1xf32>
    %35 = vector.broadcast %34 : vector<2x8x1xf32> to vector<2x8x8xf32>
    %36 = arith.subf %32, %35 : vector<2x8x8xf32>
    %37 = math.exp %36 : vector<2x8x8xf32>
    %cst_24 = arith.constant dense<0.000000e+00> : vector<2x8xf32>
    %38 = vector.multi_reduction <add>, %37, %cst_24 [2] : vector<2x8x8xf32> to vector<2x8xf32>
    %39 = vector.shape_cast %38 : vector<2x8xf32> to vector<2x8x1xf32>
    %40 = tpu.reciprocal %39 : vector<2x8x1xf32> -> vector<2x8x1xf32>
    %41 = vector.broadcast %40 : vector<2x8x1xf32> to vector<2x8x8xf32>
    %42 = arith.mulf %37, %41 : vector<2x8x8xf32>
    "tpu.trace_start"() <{level = 10 : i32, message = "bqk,bkd->bqd"}> : () -> ()
    %cst_25 = arith.constant dense<0.000000e+00> : vector<2x8x32xf32>
    %43 = tpu.matmul %42, %27, %cst_25 {dimension_numbers = #tpu.dot_dimension_numbers<[2], [1], [1], [2], [0, 0, 0, 1, 1, 2], [0], [0]>} : vector<2x8x8xf32>, vector<2x8x32xf32>, vector<2x8x32xf32> -> vector<2x8x32xf32>
    "tpu.trace_stop"() : () -> ()
    %c0_26 = arith.constant 0 : index
    %c0_27 = arith.constant 0 : index
    %c0_28 = arith.constant 0 : index
    %44 = vector.load %arg20[%c0_26, %c0_27, %c0_28] : memref<2x8x128xf32, #tpu.memory_space<vmem>>, vector<2x8x32xf32>
    tpu.vector_store %arg20[%c0_26, %c0_27, %c0_28], %43 {strides = array<i32>} : memref<2x8x128xf32, #tpu.memory_space<vmem>>, vector<2x8x32xf32>,
    %45 = vector.extract_strided_slice %19 {offsets = [0, 0, 32], sizes = [2, 8, 32], strides = [1, 1, 1]} : vector<2x8x128xf32> to vector<2x8x32xf32>
    %46 = vector.extract_strided_slice %20 {offsets = [0, 0, 32], sizes = [2, 8, 32], strides = [1, 1, 1]} : vector<2x8x128xf32> to vector<2x8x32xf32>
    %47 = vector.extract_strided_slice %21 {offsets = [0, 0, 32], sizes = [2, 8, 32], strides = [1, 1, 1]} : vector<2x8x128xf32> to vector<2x8x32xf32>
    "tpu.trace_start"() <{level = 10 : i32, message = "bqd,bkd->bqk"}> : () -> ()
    %cst_29 = arith.constant dense<0.000000e+00> : vector<2x8x8xf32>
    %48 = tpu.matmul %45, %46, %cst_29 {dimension_numbers = #tpu.dot_dimension_numbers<[2], [2], [1], [1], [0, 0, 0, 1, 1, 1], [0], [0]>} : vector<2x8x32xf32>, vector<2x8x32xf32>, vector<2x8x8xf32> -> vector<2x8x8xf32>
    %cst_30 = arith.constant -1.000000e+04 : f32
    "tpu.trace_stop"() : () -> ()
    %49 = vector.shape_cast %24 : vector<2x1x8xi1> to vector<2x1x8xi1>
    %50 = vector.broadcast %49 : vector<2x1x8xi1> to vector<2x8x8xi1>
    %51 = vector.broadcast %cst_30 : f32 to vector<2x8x8xf32>
    %52 = arith.select %50, %51, %48 : vector<2x8x8xi1>, vector<2x8x8xf32>
    %cst_31 = arith.constant dense<0xFF800000> : vector<2x8xf32>
    %53 = vector.multi_reduction <maximumf>, %52, %cst_31 [2] : vector<2x8x8xf32> to vector<2x8xf32>
    %54 = vector.shape_cast %53 : vector<2x8xf32> to vector<2x8x1xf32>
    %55 = vector.broadcast %54 : vector<2x8x1xf32> to vector<2x8x8xf32>
    %56 = arith.subf %52, %55 : vector<2x8x8xf32>
    %57 = math.exp %56 : vector<2x8x8xf32>
    %cst_32 = arith.constant dense<0.000000e+00> : vector<2x8xf32>
    %58 = vector.multi_reduction <add>, %57, %cst_32 [2] : vector<2x8x8xf32> to vector<2x8xf32>
    %59 = vector.shape_cast %58 : vector<2x8xf32> to vector<2x8x1xf32>
    %60 = tpu.reciprocal %59 : vector<2x8x1xf32> -> vector<2x8x1xf32>
    %61 = vector.broadcast %60 : vector<2x8x1xf32> to vector<2x8x8xf32>
    %62 = arith.mulf %57, %61 : vector<2x8x8xf32>
    "tpu.trace_start"() <{level = 10 : i32, message = "bqk,bkd->bqd"}> : () -> ()
    %cst_33 = arith.constant dense<0.000000e+00> : vector<2x8x32xf32>
    %63 = tpu.matmul %62, %47, %cst_33 {dimension_numbers = #tpu.dot_dimension_numbers<[2], [1], [1], [2], [0, 0, 0, 1, 1, 2], [0], [0]>} : vector<2x8x8xf32>, vector<2x8x32xf32>, vector<2x8x32xf32> -> vector<2x8x32xf32>
    "tpu.trace_stop"() : () -> ()
    %c0_34 = arith.constant 0 : index
    %c0_35 = arith.constant 0 : index
    %c32 = arith.constant 32 : index
    %64 = vector.load %arg20[%c0_34, %c0_35, %c32] : memref<2x8x128xf32, #tpu.memory_space<vmem>>, vector<2x8x32xf32>
    tpu.vector_store %arg20[%c0_34, %c0_35, %c32], %63 {strides = array<i32>} : memref<2x8x128xf32, #tpu.memory_space<vmem>>, vector<2x8x32xf32>,
    %65 = vector.extract_strided_slice %19 {offsets = [0, 0, 64], sizes = [2, 8, 32], strides = [1, 1, 1]} : vector<2x8x128xf32> to vector<2x8x32xf32>
    %66 = vector.extract_strided_slice %20 {offsets = [0, 0, 64], sizes = [2, 8, 32], strides = [1, 1, 1]} : vector<2x8x128xf32> to vector<2x8x32xf32>
    %67 = vector.extract_strided_slice %21 {offsets = [0, 0, 64], sizes = [2, 8, 32], strides = [1, 1, 1]} : vector<2x8x128xf32> to vector<2x8x32xf32>
    "tpu.trace_start"() <{level = 10 : i32, message = "bqd,bkd->bqk"}> : () -> ()
    %cst_36 = arith.constant dense<0.000000e+00> : vector<2x8x8xf32>
    %68 = tpu.matmul %65, %66, %cst_36 {dimension_numbers = #tpu.dot_dimension_numbers<[2], [2], [1], [1], [0, 0, 0, 1, 1, 1], [0], [0]>} : vector<2x8x32xf32>, vector<2x8x32xf32>, vector<2x8x8xf32> -> vector<2x8x8xf32>
    %cst_37 = arith.constant -1.000000e+04 : f32
    "tpu.trace_stop"() : () -> ()
    %69 = vector.shape_cast %24 : vector<2x1x8xi1> to vector<2x1x8xi1>
    %70 = vector.broadcast %69 : vector<2x1x8xi1> to vector<2x8x8xi1>
    %71 = vector.broadcast %cst_37 : f32 to vector<2x8x8xf32>
    %72 = arith.select %70, %71, %68 : vector<2x8x8xi1>, vector<2x8x8xf32>
    %cst_38 = arith.constant dense<0xFF800000> : vector<2x8xf32>
    %73 = vector.multi_reduction <maximumf>, %72, %cst_38 [2] : vector<2x8x8xf32> to vector<2x8xf32>
    %74 = vector.shape_cast %73 : vector<2x8xf32> to vector<2x8x1xf32>
    %75 = vector.broadcast %74 : vector<2x8x1xf32> to vector<2x8x8xf32>
    %76 = arith.subf %72, %75 : vector<2x8x8xf32>
    %77 = math.exp %76 : vector<2x8x8xf32>
    %cst_39 = arith.constant dense<0.000000e+00> : vector<2x8xf32>
    %78 = vector.multi_reduction <add>, %77, %cst_39 [2] : vector<2x8x8xf32> to vector<2x8xf32>
    %79 = vector.shape_cast %78 : vector<2x8xf32> to vector<2x8x1xf32>
    %80 = tpu.reciprocal %79 : vector<2x8x1xf32> -> vector<2x8x1xf32>
    %81 = vector.broadcast %80 : vector<2x8x1xf32> to vector<2x8x8xf32>
    %82 = arith.mulf %77, %81 : vector<2x8x8xf32>
    "tpu.trace_start"() <{level = 10 : i32, message = "bqk,bkd->bqd"}> : () -> ()
    %cst_40 = arith.constant dense<0.000000e+00> : vector<2x8x32xf32>
    %83 = tpu.matmul %82, %67, %cst_40 {dimension_numbers = #tpu.dot_dimension_numbers<[2], [1], [1], [2], [0, 0, 0, 1, 1, 2], [0], [0]>} : vector<2x8x8xf32>, vector<2x8x32xf32>, vector<2x8x32xf32> -> vector<2x8x32xf32>
    "tpu.trace_stop"() : () -> ()
    %c0_41 = arith.constant 0 : index
    %c0_42 = arith.constant 0 : index
    %c64 = arith.constant 64 : index
    %84 = vector.load %arg20[%c0_41, %c0_42, %c64] : memref<2x8x128xf32, #tpu.memory_space<vmem>>, vector<2x8x32xf32>
    tpu.vector_store %arg20[%c0_41, %c0_42, %c64], %83 {strides = array<i32>} : memref<2x8x128xf32, #tpu.memory_space<vmem>>, vector<2x8x32xf32>,
    %85 = vector.extract_strided_slice %19 {offsets = [0, 0, 96], sizes = [2, 8, 32], strides = [1, 1, 1]} : vector<2x8x128xf32> to vector<2x8x32xf32>
    %86 = vector.extract_strided_slice %20 {offsets = [0, 0, 96], sizes = [2, 8, 32], strides = [1, 1, 1]} : vector<2x8x128xf32> to vector<2x8x32xf32>
    %87 = vector.extract_strided_slice %21 {offsets = [0, 0, 96], sizes = [2, 8, 32], strides = [1, 1, 1]} : vector<2x8x128xf32> to vector<2x8x32xf32>
    "tpu.trace_start"() <{level = 10 : i32, message = "bqd,bkd->bqk"}> : () -> ()
    %cst_43 = arith.constant dense<0.000000e+00> : vector<2x8x8xf32>
    %88 = tpu.matmul %85, %86, %cst_43 {dimension_numbers = #tpu.dot_dimension_numbers<[2], [2], [1], [1], [0, 0, 0, 1, 1, 1], [0], [0]>} : vector<2x8x32xf32>, vector<2x8x32xf32>, vector<2x8x8xf32> -> vector<2x8x8xf32>
    %cst_44 = arith.constant -1.000000e+04 : f32
    "tpu.trace_stop"() : () -> ()
    %89 = vector.shape_cast %24 : vector<2x1x8xi1> to vector<2x1x8xi1>
    %90 = vector.broadcast %89 : vector<2x1x8xi1> to vector<2x8x8xi1>
    %91 = vector.broadcast %cst_44 : f32 to vector<2x8x8xf32>
    %92 = arith.select %90, %91, %88 : vector<2x8x8xi1>, vector<2x8x8xf32>
    %cst_45 = arith.constant dense<0xFF800000> : vector<2x8xf32>
    %93 = vector.multi_reduction <maximumf>, %92, %cst_45 [2] : vector<2x8x8xf32> to vector<2x8xf32>
    %94 = vector.shape_cast %93 : vector<2x8xf32> to vector<2x8x1xf32>
    %95 = vector.broadcast %94 : vector<2x8x1xf32> to vector<2x8x8xf32>
    %96 = arith.subf %92, %95 : vector<2x8x8xf32>
    %97 = math.exp %96 : vector<2x8x8xf32>
    %cst_46 = arith.constant dense<0.000000e+00> : vector<2x8xf32>
    %98 = vector.multi_reduction <add>, %97, %cst_46 [2] : vector<2x8x8xf32> to vector<2x8xf32>
    %99 = vector.shape_cast %98 : vector<2x8xf32> to vector<2x8x1xf32>
    %100 = tpu.reciprocal %99 : vector<2x8x1xf32> -> vector<2x8x1xf32>
    %101 = vector.broadcast %100 : vector<2x8x1xf32> to vector<2x8x8xf32>
    %102 = arith.mulf %97, %101 : vector<2x8x8xf32>
    "tpu.trace_start"() <{level = 10 : i32, message = "bqk,bkd->bqd"}> : () -> ()
    %cst_47 = arith.constant dense<0.000000e+00> : vector<2x8x32xf32>
    %103 = tpu.matmul %102, %87, %cst_47 {dimension_numbers = #tpu.dot_dimension_numbers<[2], [1], [1], [2], [0, 0, 0, 1, 1, 2], [0], [0]>} : vector<2x8x8xf32>, vector<2x8x32xf32>, vector<2x8x32xf32> -> vector<2x8x32xf32>
    "tpu.trace_stop"() : () -> ()
    %c0_48 = arith.constant 0 : index
    %c0_49 = arith.constant 0 : index
    %c96 = arith.constant 96 : index
    %104 = vector.load %arg20[%c0_48, %c0_49, %c96] : memref<2x8x128xf32, #tpu.memory_space<vmem>>, vector<2x8x32xf32>
    tpu.vector_store %arg20[%c0_48, %c0_49, %c96], %103 {strides = array<i32>} : memref<2x8x128xf32, #tpu.memory_space<vmem>>, vector<2x8x32xf32>,
    %c0_50 = arith.constant 0 : index
    %c0_51 = arith.constant 0 : index
    %c0_52 = arith.constant 0 : index
    %105 = vector.load %arg20[%c0_50, %c0_51, %c0_52] : memref<2x8x128xf32, #tpu.memory_space<vmem>>, vector<2x8x128xf32>
    %106 = vector.shape_cast %105 : vector<2x8x128xf32> to vector<16x128xf32>
    %c0_53 = arith.constant 0 : index
    %c0_54 = arith.constant 0 : index
    %107 = vector.load %arg9[%c0_53, %c0_54] : memref<128x128xf32, #tpu.memory_space<vmem>>, vector<128x128xf32>
    %cst_55 = arith.constant dense<0.000000e+00> : vector<16x128xf32>
    %108 = tpu.matmul %106, %107, %cst_55 {dimension_numbers = #tpu.dot_dimension_numbers<[1], [0], [0], [1], [0, 0, 1, 1], [], []>} : vector<16x128xf32>, vector<128x128xf32>, vector<16x128xf32> -> vector<16x128xf32>
    %c0_56 = arith.constant 0 : index
    %c0_57 = arith.constant 0 : index
    %109 = vector.load %arg10[%c0_56, %c0_57] : memref<1x128xf32, #tpu.memory_space<vmem>>, vector<1x128xf32>
    %110 = vector.broadcast %109 : vector<1x128xf32> to vector<16x128xf32>
    %111 = arith.addf %108, %110 : vector<16x128xf32>
    %112 = arith.addf %1, %111 : vector<16x128xf32>
    %cst_58 = arith.constant dense<0.000000e+00> : vector<16xf32>
    %113 = vector.multi_reduction <add>, %112, %cst_58 [1] : vector<16x128xf32> to vector<16xf32>
    %114 = vector.shape_cast %113 : vector<16xf32> to vector<16x1xf32>
    %cst_59 = arith.constant 1.280000e+02 : f32
    %115 = vector.broadcast %cst_59 : f32 to vector<16x1xf32>
    %116 = arith.divf %114, %115 : vector<16x1xf32>
    %117 = vector.broadcast %116 : vector<16x1xf32> to vector<16x128xf32>
    %118 = arith.subf %112, %117 : vector<16x128xf32>
    %119 = arith.mulf %118, %118 : vector<16x128xf32>
    %cst_60 = arith.constant dense<0.000000e+00> : vector<16xf32>
    %120 = vector.multi_reduction <add>, %119, %cst_60 [1] : vector<16x128xf32> to vector<16xf32>
    %121 = vector.shape_cast %120 : vector<16xf32> to vector<16x1xf32>
    %cst_61 = arith.constant 1.280000e+02 : f32
    %122 = vector.broadcast %cst_61 : f32 to vector<16x1xf32>
    %123 = arith.divf %121, %122 : vector<16x1xf32>
    %c0_62 = arith.constant 0 : index
    %c0_63 = arith.constant 0 : index
    %124 = vector.load %arg11[%c0_62, %c0_63] : memref<1x128xf32, #tpu.memory_space<vmem>>, vector<1x128xf32>
    %125 = vector.broadcast %116 : vector<16x1xf32> to vector<16x128xf32>
    %126 = arith.subf %112, %125 : vector<16x128xf32>
    %127 = vector.broadcast %124 : vector<1x128xf32> to vector<16x128xf32>
    %128 = arith.mulf %127, %126 : vector<16x128xf32>
    %cst_64 = arith.constant 9.99999996E-13 : f32
    %129 = vector.broadcast %cst_64 : f32 to vector<16x1xf32>
    %130 = arith.addf %123, %129 : vector<16x1xf32>
    %131 = math.sqrt %130 : vector<16x1xf32>
    %132 = vector.broadcast %131 : vector<16x1xf32> to vector<16x128xf32>
    %133 = arith.divf %128, %132 : vector<16x128xf32>
    %c0_65 = arith.constant 0 : index
    %c0_66 = arith.constant 0 : index
    %134 = vector.load %arg12[%c0_65, %c0_66] : memref<1x128xf32, #tpu.memory_space<vmem>>, vector<1x128xf32>
    %135 = vector.broadcast %134 : vector<1x128xf32> to vector<16x128xf32>
    %136 = arith.addf %133, %135 : vector<16x128xf32>
    %c0_67 = arith.constant 0 : index
    %c0_68 = arith.constant 0 : index
    %137 = vector.load %arg13[%c0_67, %c0_68] : memref<128x256xf32, #tpu.memory_space<vmem>>, vector<128x256xf32>
    %cst_69 = arith.constant dense<0.000000e+00> : vector<16x256xf32>
    %138 = tpu.matmul %136, %137, %cst_69 {dimension_numbers = #tpu.dot_dimension_numbers<[1], [0], [0], [1], [0, 0, 1, 1], [], []>} : vector<16x128xf32>, vector<128x256xf32>, vector<16x256xf32> -> vector<16x256xf32>
    %c0_70 = arith.constant 0 : index
    %c0_71 = arith.constant 0 : index
    %139 = vector.load %arg14[%c0_70, %c0_71] : memref<1x256xf32, #tpu.memory_space<vmem>>, vector<1x256xf32>
    %140 = vector.broadcast %139 : vector<1x256xf32> to vector<16x256xf32>
    %141 = arith.addf %138, %140 : vector<16x256xf32>
    %cst_72 = arith.constant 0.000000e+00 : f32
    %142 = vector.broadcast %cst_72 : f32 to vector<16x256xf32>
    %143 = arith.maximumf %141, %142 : vector<16x256xf32>
    %c0_73 = arith.constant 0 : index
    %c0_74 = arith.constant 0 : index
    %144 = vector.load %arg15[%c0_73, %c0_74] : memref<256x128xf32, #tpu.memory_space<vmem>>, vector<256x128xf32>
    %cst_75 = arith.constant dense<0.000000e+00> : vector<16x128xf32>
    %145 = tpu.matmul %143, %144, %cst_75 {dimension_numbers = #tpu.dot_dimension_numbers<[1], [0], [0], [1], [0, 0, 1, 1], [], []>} : vector<16x256xf32>, vector<256x128xf32>, vector<16x128xf32> -> vector<16x128xf32>
    %c0_76 = arith.constant 0 : index
    %c0_77 = arith.constant 0 : index
    %146 = vector.load %arg16[%c0_76, %c0_77] : memref<1x128xf32, #tpu.memory_space<vmem>>, vector<1x128xf32>
    %147 = vector.broadcast %146 : vector<1x128xf32> to vector<16x128xf32>
    %148 = arith.addf %145, %147 : vector<16x128xf32>
    %149 = arith.addf %136, %148 : vector<16x128xf32>
    %cst_78 = arith.constant dense<0.000000e+00> : vector<16xf32>
    %150 = vector.multi_reduction <add>, %149, %cst_78 [1] : vector<16x128xf32> to vector<16xf32>
    %151 = vector.shape_cast %150 : vector<16xf32> to vector<16x1xf32>
    %cst_79 = arith.constant 1.280000e+02 : f32
    %152 = vector.broadcast %cst_79 : f32 to vector<16x1xf32>
    %153 = arith.divf %151, %152 : vector<16x1xf32>
    %154 = vector.broadcast %153 : vector<16x1xf32> to vector<16x128xf32>
    %155 = arith.subf %149, %154 : vector<16x128xf32>
    %156 = arith.mulf %155, %155 : vector<16x128xf32>
    %cst_80 = arith.constant dense<0.000000e+00> : vector<16xf32>
    %157 = vector.multi_reduction <add>, %156, %cst_80 [1] : vector<16x128xf32> to vector<16xf32>
    %158 = vector.shape_cast %157 : vector<16xf32> to vector<16x1xf32>
    %cst_81 = arith.constant 1.280000e+02 : f32
    %159 = vector.broadcast %cst_81 : f32 to vector<16x1xf32>
    %160 = arith.divf %158, %159 : vector<16x1xf32>
    %c0_82 = arith.constant 0 : index
    %c0_83 = arith.constant 0 : index
    %161 = vector.load %arg17[%c0_82, %c0_83] : memref<1x128xf32, #tpu.memory_space<vmem>>, vector<1x128xf32>
    %162 = vector.broadcast %153 : vector<16x1xf32> to vector<16x128xf32>
    %163 = arith.subf %149, %162 : vector<16x128xf32>
    %164 = vector.broadcast %161 : vector<1x128xf32> to vector<16x128xf32>
    %165 = arith.mulf %164, %163 : vector<16x128xf32>
    %cst_84 = arith.constant 9.99999996E-13 : f32
    %166 = vector.broadcast %cst_84 : f32 to vector<16x1xf32>
    %167 = arith.addf %160, %166 : vector<16x1xf32>
    %168 = math.sqrt %167 : vector<16x1xf32>
    %169 = vector.broadcast %168 : vector<16x1xf32> to vector<16x128xf32>
    %170 = arith.divf %165, %169 : vector<16x128xf32>
    %c0_85 = arith.constant 0 : index
    %c0_86 = arith.constant 0 : index
    %171 = vector.load %arg18[%c0_85, %c0_86] : memref<1x128xf32, #tpu.memory_space<vmem>>, vector<1x128xf32>
    %172 = vector.broadcast %171 : vector<1x128xf32> to vector<16x128xf32>
    %173 = arith.addf %170, %172 : vector<16x128xf32>
    %174 = vector.shape_cast %173 : vector<16x128xf32> to vector<2x8x128xf32>
    %c0_87 = arith.constant 0 : index
    %c0_88 = arith.constant 0 : index
    %c0_89 = arith.constant 0 : index
    %175 = vector.load %arg19[%c0_87, %c0_88, %c0_89] : memref<2x8x128xf32, #tpu.memory_space<vmem>>, vector<2x8x128xf32>
    tpu.vector_store %arg19[%c0_87, %c0_88, %c0_89], %174 {strides = array<i32>} : memref<2x8x128xf32, #tpu.memory_space<vmem>>, vector<2x8x128xf32>,
    return
  }
  func.func @transform_0(%arg0: i32) -> (i32, i32, i32) {
    %c0_i32 = arith.constant 0 : i32
    %c0_i32_0 = arith.constant 0 : i32
    %c0_i32_1 = arith.constant 0 : i32
    return %arg0, %c0_i32, %c0_i32_0 : i32, i32, i32
  }
  func.func @transform_1(%arg0: i32) -> (i32, i32, i32) {
    %c0_i32 = arith.constant 0 : i32
    %c0_i32_0 = arith.constant 0 : i32
    %c0_i32_1 = arith.constant 0 : i32
    return %arg0, %c0_i32, %c0_i32_0 : i32, i32, i32
  }
  func.func @transform_2(%arg0: i32) -> (i32, i32) {
    %c0_i32 = arith.constant 0 : i32
    %c0_i32_0 = arith.constant 0 : i32
    %c0_i32_1 = arith.constant 0 : i32
    return %c0_i32, %c0_i32_0 : i32, i32
  }
  func.func @transform_3(%arg0: i32) -> (i32, i32) {
    %c0_i32 = arith.constant 0 : i32
    %c0_i32_0 = arith.constant 0 : i32
    %c0_i32_1 = arith.constant 0 : i32
    return %c0_i32, %c0_i32_0 : i32, i32
  }
  func.func @transform_4(%arg0: i32) -> (i32, i32) {
    %c0_i32 = arith.constant 0 : i32
    %c0_i32_0 = arith.constant 0 : i32
    %c0_i32_1 = arith.constant 0 : i32
    return %c0_i32, %c0_i32_0 : i32, i32
  }
  func.func @transform_5(%arg0: i32) -> (i32, i32) {
    %c0_i32 = arith.constant 0 : i32
    %c0_i32_0 = arith.constant 0 : i32
    %c0_i32_1 = arith.constant 0 : i32
    return %c0_i32, %c0_i32_0 : i32, i32
  }
  func.func @transform_6(%arg0: i32) -> (i32, i32) {
    %c0_i32 = arith.constant 0 : i32
    %c0_i32_0 = arith.constant 0 : i32
    %c0_i32_1 = arith.constant 0 : i32
    return %c0_i32, %c0_i32_0 : i32, i32
  }
  func.func @transform_7(%arg0: i32) -> (i32, i32) {
    %c0_i32 = arith.constant 0 : i32
    %c0_i32_0 = arith.constant 0 : i32
    %c0_i32_1 = arith.constant 0 : i32
    return %c0_i32, %c0_i32_0 : i32, i32
  }
  func.func @transform_8(%arg0: i32) -> (i32, i32) {
    %c0_i32 = arith.constant 0 : i32
    %c0_i32_0 = arith.constant 0 : i32
    %c0_i32_1 = arith.constant 0 : i32
    return %c0_i32, %c0_i32_0 : i32, i32
  }
  func.func @transform_9(%arg0: i32) -> (i32, i32) {
    %c0_i32 = arith.constant 0 : i32
    %c0_i32_0 = arith.constant 0 : i32
    %c0_i32_1 = arith.constant 0 : i32
    return %c0_i32, %c0_i32_0 : i32, i32
  }
  func.func @transform_10(%arg0: i32) -> (i32, i32) {
    %c0_i32 = arith.constant 0 : i32
    %c0_i32_0 = arith.constant 0 : i32
    %c0_i32_1 = arith.constant 0 : i32
    return %c0_i32, %c0_i32_0 : i32, i32
  }
  func.func @transform_11(%arg0: i32) -> (i32, i32) {
    %c0_i32 = arith.constant 0 : i32
    %c0_i32_0 = arith.constant 0 : i32
    %c0_i32_1 = arith.constant 0 : i32
    return %c0_i32, %c0_i32_0 : i32, i32
  }
  func.func @transform_12(%arg0: i32) -> (i32, i32) {
    %c0_i32 = arith.constant 0 : i32
    %c0_i32_0 = arith.constant 0 : i32
    %c0_i32_1 = arith.constant 0 : i32
    return %c0_i32, %c0_i32_0 : i32, i32
  }
  func.func @transform_13(%arg0: i32) -> (i32, i32) {
    %c0_i32 = arith.constant 0 : i32
    %c0_i32_0 = arith.constant 0 : i32
    %c0_i32_1 = arith.constant 0 : i32
    return %c0_i32, %c0_i32_0 : i32, i32
  }
  func.func @transform_14(%arg0: i32) -> (i32, i32) {
    %c0_i32 = arith.constant 0 : i32
    %c0_i32_0 = arith.constant 0 : i32
    %c0_i32_1 = arith.constant 0 : i32
    return %c0_i32, %c0_i32_0 : i32, i32
  }
  func.func @transform_15(%arg0: i32) -> (i32, i32) {
    %c0_i32 = arith.constant 0 : i32
    %c0_i32_0 = arith.constant 0 : i32
    %c0_i32_1 = arith.constant 0 : i32
    return %c0_i32, %c0_i32_0 : i32, i32
  }
  func.func @transform_16(%arg0: i32) -> (i32, i32) {
    %c0_i32 = arith.constant 0 : i32
    %c0_i32_0 = arith.constant 0 : i32
    %c0_i32_1 = arith.constant 0 : i32
    return %c0_i32, %c0_i32_0 : i32, i32
  }
  func.func @transform_17(%arg0: i32) -> (i32, i32) {
    %c0_i32 = arith.constant 0 : i32
    %c0_i32_0 = arith.constant 0 : i32
    %c0_i32_1 = arith.constant 0 : i32
    return %c0_i32, %c0_i32_0 : i32, i32
  }
  func.func @transform_18(%arg0: i32) -> (i32, i32, i32) {
    %c0_i32 = arith.constant 0 : i32
    %c0_i32_0 = arith.constant 0 : i32
    %c0_i32_1 = arith.constant 0 : i32
    return %arg0, %c0_i32, %c0_i32_0 : i32, i32, i32
  }
}

</mosaic_0001>

<llo_original>
// kernel: tpu_custom_call.1
$region0: #{tpu_custom_call.1}
  #allocation0 [shape = 'u32[]', space=smem, size = 0x4, offset = 0x4, fixed_abs, tag = 'smem constant byte address 0x4 - core index']
  #allocation1 [shape = 'u32[72,128]{1,0:T(1,128)}', space=vmem, size = 0x9000, scoped, tag = 'internal scratch']
  #allocation2 [shape = 'f32[2,8,128]{2,1,0:T(8,128)}', space=vmem, size = 0x2000, scoped, tag = 'scratch operand']
  %s0 = inlined_call_operand.hbm [shape: f32[4,8,128], index: 0, kind: input, shape index: {}]
  %s1 = inlined_call_operand.hbm [shape: f32[4,1,8], index: 1, kind: input, shape index: {}]
  %s2 = inlined_call_operand.hbm [shape: f32[128,128], index: 2, kind: input, shape index: {}]
  %s3 = inlined_call_operand.vmem [shape: f32[1,128], index: 3, kind: input, shape index: {}]
  %s4 = inlined_call_operand.hbm [shape: f32[128,128], index: 4, kind: input, shape index: {}]
  %s5 = inlined_call_operand.vmem [shape: f32[1,128], index: 5, kind: input, shape index: {}]
  %s6 = inlined_call_operand.hbm [shape: f32[128,128], index: 6, kind: input, shape index: {}]
  %s7 = inlined_call_operand.vmem [shape: f32[1,128], index: 7, kind: input, shape index: {}]
  %s8 = inlined_call_operand.hbm [shape: f32[128,128], index: 8, kind: input, shape index: {}]
  %s9 = inlined_call_operand.vmem [shape: f32[1,128], index: 9, kind: input, shape index: {}]
  %s10 = inlined_call_operand.vmem [shape: f32[1,128], index: 10, kind: input, shape index: {}]
  %s11 = inlined_call_operand.vmem [shape: f32[1,128], index: 11, kind: input, shape index: {}]
  %s12 = inlined_call_operand.hbm [shape: f32[128,256], index: 12, kind: input, shape index: {}]
  %s13 = inlined_call_operand.vmem [shape: f32[1,256], index: 13, kind: input, shape index: {}]
  %s14 = inlined_call_operand.hbm [shape: f32[256,128], index: 14, kind: input, shape index: {}]
  %s15 = inlined_call_operand.vmem [shape: f32[1,128], index: 15, kind: input, shape index: {}]
  %s16 = inlined_call_operand.vmem [shape: f32[1,128], index: 16, kind: input, shape index: {}]
  %s17 = inlined_call_operand.vmem [shape: f32[1,128], index: 17, kind: input, shape index: {}]
  %s18 = inlined_call_operand.hbm [shape: f32[4,8,128], index: 18, kind: output, shape index: {}]
  %s19 = sld [smem:[#allocation0]]
  $region137: #{tpu_custom_call.1} parent=0
    _
  %s21 = ssub.s32 1, %s19
  %s22 = scalar_select 0, %s21, %s19
  $region1: #{tpu_custom_call.1} parent=0
    #allocation3 [shape = 'u8[16384]{0}', space=vmem, size = 0x4000, scoped, tag = 'input window, operand 0']
    #allocation4 [shape = 's32[2]{0}', space=sflag, size = 0x8, scoped, tag = 'scoped memory for tpu_custom_call.1']
    #allocation5 [shape = 's32[2]{0}', space=sflag, size = 0x8, scoped, tag = 'scoped memory for tpu_custom_call.1']
    #allocation6 [shape = 'u8[2048]{0}', space=vmem, size = 0x800, scoped, tag = 'input window, operand 1']
    #allocation7 [shape = 's32[2]{0}', space=sflag, size = 0x8, scoped, tag = 'scoped memory for tpu_custom_call.1']
    #allocation8 [shape = 'u8[65536]{0}', space=vmem, size = 0x10000, scoped, tag = 'input window, operand 2, single buffered']
    #allocation9 [shape = 'u8[65536]{0}', space=vmem, size = 0x10000, scoped, tag = 'input window, operand 4, single buffered']
    #allocation10 [shape = 's32[1]{0}', space=sflag, size = 0x4, scoped, tag = 'scoped memory for tpu_custom_call.1']
    #allocation11 [shape = 'u8[65536]{0}', space=vmem, size = 0x10000, scoped, tag = 'input window, operand 6, single buffered']
    #allocation12 [shape = 'u8[65536]{0}', space=vmem, size = 0x10000, scoped, tag = 'input window, operand 8, single buffered']
    #allocation13 [shape = 's32[1]{0}', space=sflag, size = 0x4, scoped, tag = 'scoped memory for tpu_custom_call.1']
    #allocation14 [shape = 'u8[131072]{0}', space=vmem, size = 0x20000, scoped, tag = 'input window, operand 12, single buffered']
    #allocation15 [shape = 'u8[131072]{0}', space=vmem, size = 0x20000, scoped, tag = 'input window, operand 14, single buffered']
    #allocation16 [shape = 's32[1]{0}', space=sflag, size = 0x4, scoped, tag = 'scoped memory for tpu_custom_call.1']
    #allocation17 [shape = 'u8[16384]{0}', space=vmem, size = 0x4000, scoped, tag = 'output window, operand 0']
    %23 = vsyncpa [#allocation4], 0
    %s24 = scalar_lea.sflag [#allocation4], 1
    %25 = vsyncpa %s24, 0
    %26 = vsyncpa [#allocation7], 0
    %s27 = scalar_lea.sflag [#allocation7], 1
    %28 = vsyncpa %s27, 0
    %29 = vsyncpa [#allocation10], 0
    %30 = vsyncpa [#allocation13], 0
    %31 = vsyncpa [#allocation16], 0
    %32 = vsyncpa [#allocation5], 0
    %s33 = scalar_lea.sflag [#allocation5], 1
    %34 = vsyncpa %s33, 0
    loop: start=0, step=1, limit=4
    $region2: #{tpu_custom_call.1} parent=1 // loop_pre_header
      _
    $region3: #{tpu_custom_call.1} parent=1 // loop_header
      %s36 = sphi 0, %s40
      %p37 = scmp.ge.s32.totalorder %s36, 4
      %s46 = sphi 0, %s48
      %s49 = sphi 0, %s46
      %s50 = sphi 0, %s49
      %s66 = sphi 0, %s50
      %s72 = sphi 0, %s74
      %s75 = sphi 0, %s72
      %s76 = sphi 0, %s75
      %s92 = sphi 0, %s76
      %s96 = sphi 0, %s96
      %s98 = sphi 0, %s96
      %s99 = sphi 0, %s98
      %s113 = sphi 0, %s99
      %s117 = sphi 0, %s117
      %s119 = sphi 0, %s117
      %s120 = sphi 0, %s119
      %s134 = sphi 0, %s120
      %s138 = sphi 0, %s138
      %s140 = sphi 0, %s138
      %s141 = sphi 0, %s140
      %s155 = sphi 0, %s141
      %s159 = sphi 0, %s159
      %s161 = sphi 0, %s159
      %s162 = sphi 0, %s161
      %s176 = sphi 0, %s162
      %s180 = sphi 0, %s180
      %s182 = sphi 0, %s180
      %s183 = sphi 0, %s182
      %s197 = sphi 0, %s183
      %s201 = sphi 0, %s201
      %s203 = sphi 0, %s201
      %s204 = sphi 0, %s203
      %s218 = sphi 0, %s204
      %s222 = sphi 0, %s222
      %s224 = sphi 0, %s222
      %s225 = sphi 0, %s224
      %s239 = sphi 0, %s225
      %s243 = sphi 0, %s243
      %s245 = sphi 0, %s243
      %s246 = sphi 0, %s245
      %s260 = sphi 0, %s246
      %s264 = sphi 0, %s264
      %s266 = sphi 0, %s264
      %s267 = sphi 0, %s266
      %s281 = sphi 0, %s267
      %s285 = sphi 0, %s285
      %s287 = sphi 0, %s285
      %s288 = sphi 0, %s287
      %s302 = sphi 0, %s288
      %s306 = sphi 0, %s306
      %s308 = sphi 0, %s306
      %s309 = sphi 0, %s308
      %s323 = sphi 0, %s309
      %s327 = sphi 0, %s327
      %s329 = sphi 0, %s327
      %s330 = sphi 0, %s329
      %s344 = sphi 0, %s330
      %s348 = sphi 0, %s348
      %s350 = sphi 0, %s348
      %s351 = sphi 0, %s350
      %s365 = sphi 0, %s351
      %s369 = sphi 0, %s369
      %s371 = sphi 0, %s369
      %s372 = sphi 0, %s371
      %s386 = sphi 0, %s372
      %s390 = sphi 0, %s390
      %s392 = sphi 0, %s390
      %s393 = sphi 0, %s392
      %s407 = sphi 0, %s393
      %s411 = sphi 0, %s411
      %s413 = sphi 0, %s411
      %s414 = sphi 0, %s413
      %s428 = sphi 0, %s414
      %s434 = sphi 0, %s436
      %s437 = sphi 0, %s434
      %s438 = sphi 0, %s437
      %s454 = sphi 0, %s438
    $region4: #{tpu_custom_call.1} parent=1 // loop_header_branch
      %39 = sbr.rel (%p37) target = $region8
    $region5: #{tpu_custom_call.1} parent=1 // loop_body
      %s41 = ssub.s32 %s36, 1
      %s42 = ssub.s32 %s36, 2
      %s43 = sadd.s32 %s36, 1
      %s44 = ssub.s32 %s36, %s43
      %p45 = scmp.eq.s32.totalorder %s44, 0
      %s47 = sadd.s32 %s46, 1
      %s48 = scalar_select %p45, %s46, %s47
      %p51 = pneg %p45
      %p52 = scmp.eq.s32.totalorder %s36, 1
      %p53 = por %p51, %p52
      %p54 = scmp.ne.s32.totalorder %s46, %s49
      %p55 = scmp.eq.s32.totalorder %s36, 0
      %p56 = por %p54, %p55
      %p57 = scmp.ne.s32.totalorder %s46, %s49
      %p58 = scmp.eq.s32.totalorder %s41, 1
      %p59 = por %p57, %p58
      %p60 = scmp.ne.s32.totalorder %s49, %s50
      %p61 = scmp.eq.s32.totalorder %s41, 0
      %p62 = por %p60, %p61
      %p63 = scmp.ne.s32.totalorder %s49, %s50
      %p64 = scmp.eq.s32.totalorder %s42, 1
      %p65 = por %p63, %p64
      %p67 = scmp.ne.s32.totalorder %s50, %s66
      %p68 = scmp.eq.s32.totalorder %s42, 0
      %p69 = por %p67, %p68
      %s70 = ssub.s32 %s36, %s43
      %p71 = scmp.eq.s32.totalorder %s70, 0
      %s73 = sadd.s32 %s72, 1
      %s74 = scalar_select %p71, %s72, %s73
      %p77 = pneg %p71
      %p78 = scmp.eq.s32.totalorder %s36, 1
      %p79 = por %p77, %p78
      %p80 = scmp.ne.s32.totalorder %s72, %s75
      %p81 = scmp.eq.s32.totalorder %s36, 0
      %p82 = por %p80, %p81
      %p83 = scmp.ne.s32.totalorder %s72, %s75
      %p84 = scmp.eq.s32.totalorder %s41, 1
      %p85 = por %p83, %p84
      %p86 = scmp.ne.s32.totalorder %s75, %s76
      %p87 = scmp.eq.s32.totalorder %s41, 0
      %p88 = por %p86, %p87
      %p89 = scmp.ne.s32.totalorder %s75, %s76
      %p90 = scmp.eq.s32.totalorder %s42, 1
      %p91 = por %p89, %p90
      %p93 = scmp.ne.s32.totalorder %s76, %s92
      %p94 = scmp.eq.s32.totalorder %s42, 0
      %p95 = por %p93, %p94
      %s97 = sadd.s32 %s96, 1
      %p100 = scmp.eq.s32.totalorder %s36, 1
      %p101 = scmp.ne.s32.totalorder %s96, %s98
      %p102 = scmp.eq.s32.totalorder %s36, 0
      %p103 = por %p101, %p102
      %p104 = scmp.ne.s32.totalorder %s96, %s98
      %p105 = scmp.eq.s32.totalorder %s41, 1
      %p106 = por %p104, %p105
      %p107 = scmp.ne.s32.totalorder %s98, %s99
      %p108 = scmp.eq.s32.totalorder %s41, 0
      %p109 = por %p107, %p108
      %p110 = scmp.ne.s32.totalorder %s98, %s99
      %p111 = scmp.eq.s32.totalorder %s42, 1
      %p112 = por %p110, %p111
      %p114 = scmp.ne.s32.totalorder %s99, %s113
      %p115 = scmp.eq.s32.totalorder %s42, 0
      %p116 = por %p114, %p115
      %s118 = sadd.s32 %s117, 1
      %p121 = scmp.eq.s32.totalorder %s36, 1
      %p122 = scmp.ne.s32.totalorder %s117, %s119
      %p123 = scmp.eq.s32.totalorder %s36, 0
      %p124 = por %p122, %p123
      %p125 = scmp.ne.s32.totalorder %s117, %s119
      %p126 = scmp.eq.s32.totalorder %s41, 1
      %p127 = por %p125, %p126
      %p128 = scmp.ne.s32.totalorder %s119, %s120
      %p129 = scmp.eq.s32.totalorder %s41, 0
      %p130 = por %p128, %p129
      %p131 = scmp.ne.s32.totalorder %s119, %s120
      %p132 = scmp.eq.s32.totalorder %s42, 1
      %p133 = por %p131, %p132
      %p135 = scmp.ne.s32.totalorder %s120, %s134
      %p136 = scmp.eq.s32.totalorder %s42, 0
      %p137 = por %p135, %p136
      %s139 = sadd.s32 %s138, 1
      %p142 = scmp.eq.s32.totalorder %s36, 1
      %p143 = scmp.ne.s32.totalorder %s138, %s140
      %p144 = scmp.eq.s32.totalorder %s36, 0
      %p145 = por %p143, %p144
      %p146 = scmp.ne.s32.totalorder %s138, %s140
      %p147 = scmp.eq.s32.totalorder %s41, 1
      %p148 = por %p146, %p147
      %p149 = scmp.ne.s32.totalorder %s140, %s141
      %p150 = scmp.eq.s32.totalorder %s41, 0
      %p151 = por %p149, %p150
      %p152 = scmp.ne.s32.totalorder %s140, %s141
      %p153 = scmp.eq.s32.totalorder %s42, 1
      %p154 = por %p152, %p153
      %p156 = scmp.ne.s32.totalorder %s141, %s155
      %p157 = scmp.eq.s32.totalorder %s42, 0
      %p158 = por %p156, %p157
      %s160 = sadd.s32 %s159, 1
      %p163 = scmp.eq.s32.totalorder %s36, 1
      %p164 = scmp.ne.s32.totalorder %s159, %s161
      %p165 = scmp.eq.s32.totalorder %s36, 0
      %p166 = por %p164, %p165
      %p167 = scmp.ne.s32.totalorder %s159, %s161
      %p168 = scmp.eq.s32.totalorder %s41, 1
      %p169 = por %p167, %p168
      %p170 = scmp.ne.s32.totalorder %s161, %s162
      %p171 = scmp.eq.s32.totalorder %s41, 0
      %p172 = por %p170, %p171
      %p173 = scmp.ne.s32.totalorder %s161, %s162
      %p174 = scmp.eq.s32.totalorder %s42, 1
      %p175 = por %p173, %p174
      %p177 = scmp.ne.s32.totalorder %s162, %s176
      %p178 = scmp.eq.s32.totalorder %s42, 0
      %p179 = por %p177, %p178
      %s181 = sadd.s32 %s180, 1
      %p184 = scmp.eq.s32.totalorder %s36, 1
      %p185 = scmp.ne.s32.totalorder %s180, %s182
      %p186 = scmp.eq.s32.totalorder %s36, 0
      %p187 = por %p185, %p186
      %p188 = scmp.ne.s32.totalorder %s180, %s182
      %p189 = scmp.eq.s32.totalorder %s41, 1
      %p190 = por %p188, %p189
      %p191 = scmp.ne.s32.totalorder %s182, %s183
      %p192 = scmp.eq.s32.totalorder %s41, 0
      %p193 = por %p191, %p192
      %p194 = scmp.ne.s32.totalorder %s182, %s183
      %p195 = scmp.eq.s32.totalorder %s42, 1
      %p196 = por %p194, %p195
      %p198 = scmp.ne.s32.totalorder %s183, %s197
      %p199 = scmp.eq.s32.totalorder %s42, 0
      %p200 = por %p198, %p199
      %s202 = sadd.s32 %s201, 1
      %p205 = scmp.eq.s32.totalorder %s36, 1
      %p206 = scmp.ne.s32.totalorder %s201, %s203
      %p207 = scmp.eq.s32.totalorder %s36, 0
      %p208 = por %p206, %p207
      %p209 = scmp.ne.s32.totalorder %s201, %s203
      %p210 = scmp.eq.s32.totalorder %s41, 1
      %p211 = por %p209, %p210
      %p212 = scmp.ne.s32.totalorder %s203, %s204
      %p213 = scmp.eq.s32.totalorder %s41, 0
      %p214 = por %p212, %p213
      %p215 = scmp.ne.s32.totalorder %s203, %s204
      %p216 = scmp.eq.s32.totalorder %s42, 1
      %p217 = por %p215, %p216
      %p219 = scmp.ne.s32.totalorder %s204, %s218
      %p220 = scmp.eq.s32.totalorder %s42, 0
      %p221 = por %p219, %p220
      %s223 = sadd.s32 %s222, 1
      %p226 = scmp.eq.s32.totalorder %s36, 1
      %p227 = scmp.ne.s32.totalorder %s222, %s224
      %p228 = scmp.eq.s32.totalorder %s36, 0
      %p229 = por %p227, %p228
      %p230 = scmp.ne.s32.totalorder %s222, %s224
      %p231 = scmp.eq.s32.totalorder %s41, 1
      %p232 = por %p230, %p231
      %p233 = scmp.ne.s32.totalorder %s224, %s225
      %p234 = scmp.eq.s32.totalorder %s41, 0
      %p235 = por %p233, %p234
      %p236 = scmp.ne.s32.totalorder %s224, %s225
      %p237 = scmp.eq.s32.totalorder %s42, 1
      %p238 = por %p236, %p237
      %p240 = scmp.ne.s32.totalorder %s225, %s239
      %p241 = scmp.eq.s32.totalorder %s42, 0
      %p242 = por %p240, %p241
      %s244 = sadd.s32 %s243, 1
      %p247 = scmp.eq.s32.totalorder %s36, 1
      %p248 = scmp.ne.s32.totalorder %s243, %s245
      %p249 = scmp.eq.s32.totalorder %s36, 0
      %p250 = por %p248, %p249
      %p251 = scmp.ne.s32.totalorder %s243, %s245
      %p252 = scmp.eq.s32.totalorder %s41, 1
      %p253 = por %p251, %p252
      %p254 = scmp.ne.s32.totalorder %s245, %s246
      %p255 = scmp.eq.s32.totalorder %s41, 0
      %p256 = por %p254, %p255
      %p257 = scmp.ne.s32.totalorder %s245, %s246
      %p258 = scmp.eq.s32.totalorder %s42, 1
      %p259 = por %p257, %p258
      %p261 = scmp.ne.s32.totalorder %s246, %s260
      %p262 = scmp.eq.s32.totalorder %s42, 0
      %p263 = por %p261, %p262
      %s265 = sadd.s32 %s264, 1
      %p268 = scmp.eq.s32.totalorder %s36, 1
      %p269 = scmp.ne.s32.totalorder %s264, %s266
      %p270 = scmp.eq.s32.totalorder %s36, 0
      %p271 = por %p269, %p270
      %p272 = scmp.ne.s32.totalorder %s264, %s266
      %p273 = scmp.eq.s32.totalorder %s41, 1
      %p274 = por %p272, %p273
      %p275 = scmp.ne.s32.totalorder %s266, %s267
      %p276 = scmp.eq.s32.totalorder %s41, 0
      %p277 = por %p275, %p276
      %p278 = scmp.ne.s32.totalorder %s266, %s267
      %p279 = scmp.eq.s32.totalorder %s42, 1
      %p280 = por %p278, %p279
      %p282 = scmp.ne.s32.totalorder %s267, %s281
      %p283 = scmp.eq.s32.totalorder %s42, 0
      %p284 = por %p282, %p283
      %s286 = sadd.s32 %s285, 1
      %p289 = scmp.eq.s32.totalorder %s36, 1
      %p290 = scmp.ne.s32.totalorder %s285, %s287
      %p291 = scmp.eq.s32.totalorder %s36, 0
      %p292 = por %p290, %p291
      %p293 = scmp.ne.s32.totalorder %s285, %s287
      %p294 = scmp.eq.s32.totalorder %s41, 1
      %p295 = por %p293, %p294
      %p296 = scmp.ne.s32.totalorder %s287, %s288
      %p297 = scmp.eq.s32.totalorder %s41, 0
      %p298 = por %p296, %p297
      %p299 = scmp.ne.s32.totalorder %s287, %s288
      %p300 = scmp.eq.s32.totalorder %s42, 1
      %p301 = por %p299, %p300
      %p303 = scmp.ne.s32.totalorder %s288, %s302
      %p304 = scmp.eq.s32.totalorder %s42, 0
      %p305 = por %p303, %p304
      %s307 = sadd.s32 %s306, 1
      %p310 = scmp.eq.s32.totalorder %s36, 1
      %p311 = scmp.ne.s32.totalorder %s306, %s308
      %p312 = scmp.eq.s32.totalorder %s36, 0
      %p313 = por %p311, %p312
      %p314 = scmp.ne.s32.totalorder %s306, %s308
      %p315 = scmp.eq.s32.totalorder %s41, 1
      %p316 = por %p314, %p315
      %p317 = scmp.ne.s32.totalorder %s308, %s309
      %p318 = scmp.eq.s32.totalorder %s41, 0
      %p319 = por %p317, %p318
      %p320 = scmp.ne.s32.totalorder %s308, %s309
      %p321 = scmp.eq.s32.totalorder %s42, 1
      %p322 = por %p320, %p321
      %p324 = scmp.ne.s32.totalorder %s309, %s323
      %p325 = scmp.eq.s32.totalorder %s42, 0
      %p326 = por %p324, %p325
      %s328 = sadd.s32 %s327, 1
      %p331 = scmp.eq.s32.totalorder %s36, 1
      %p332 = scmp.ne.s32.totalorder %s327, %s329
      %p333 = scmp.eq.s32.totalorder %s36, 0
      %p334 = por %p332, %p333
      %p335 = scmp.ne.s32.totalorder %s327, %s329
      %p336 = scmp.eq.s32.totalorder %s41, 1
      %p337 = por %p335, %p336
      %p338 = scmp.ne.s32.totalorder %s329, %s330
      %p339 = scmp.eq.s32.totalorder %s41, 0
      %p340 = por %p338, %p339
      %p341 = scmp.ne.s32.totalorder %s329, %s330
      %p342 = scmp.eq.s32.totalorder %s42, 1
      %p343 = por %p341, %p342
      %p345 = scmp.ne.s32.totalorder %s330, %s344
      %p346 = scmp.eq.s32.totalorder %s42, 0
      %p347 = por %p345, %p346
      %s349 = sadd.s32 %s348, 1
      %p352 = scmp.eq.s32.totalorder %s36, 1
      %p353 = scmp.ne.s32.totalorder %s348, %s350
      %p354 = scmp.eq.s32.totalorder %s36, 0
      %p355 = por %p353, %p354
      %p356 = scmp.ne.s32.totalorder %s348, %s350
      %p357 = scmp.eq.s32.totalorder %s41, 1
      %p358 = por %p356, %p357
      %p359 = scmp.ne.s32.totalorder %s350, %s351
      %p360 = scmp.eq.s32.totalorder %s41, 0
      %p361 = por %p359, %p360
      %p362 = scmp.ne.s32.totalorder %s350, %s351
      %p363 = scmp.eq.s32.totalorder %s42, 1
      %p364 = por %p362, %p363
      %p366 = scmp.ne.s32.totalorder %s351, %s365
      %p367 = scmp.eq.s32.totalorder %s42, 0
      %p368 = por %p366, %p367
      %s370 = sadd.s32 %s369, 1
      %p373 = scmp.eq.s32.totalorder %s36, 1
      %p374 = scmp.ne.s32.totalorder %s369, %s371
      %p375 = scmp.eq.s32.totalorder %s36, 0
      %p376 = por %p374, %p375
      %p377 = scmp.ne.s32.totalorder %s369, %s371
      %p378 = scmp.eq.s32.totalorder %s41, 1
      %p379 = por %p377, %p378
      %p380 = scmp.ne.s32.totalorder %s371, %s372
      %p381 = scmp.eq.s32.totalorder %s41, 0
      %p382 = por %p380, %p381
      %p383 = scmp.ne.s32.totalorder %s371, %s372
      %p384 = scmp.eq.s32.totalorder %s42, 1
      %p385 = por %p383, %p384
      %p387 = scmp.ne.s32.totalorder %s372, %s386
      %p388 = scmp.eq.s32.totalorder %s42, 0
      %p389 = por %p387, %p388
      %s391 = sadd.s32 %s390, 1
      %p394 = scmp.eq.s32.totalorder %s36, 1
      %p395 = scmp.ne.s32.totalorder %s390, %s392
      %p396 = scmp.eq.s32.totalorder %s36, 0
      %p397 = por %p395, %p396
      %p398 = scmp.ne.s32.totalorder %s390, %s392
      %p399 = scmp.eq.s32.totalorder %s41, 1
      %p400 = por %p398, %p399
      %p401 = scmp.ne.s32.totalorder %s392, %s393
      %p402 = scmp.eq.s32.totalorder %s41, 0
      %p403 = por %p401, %p402
      %p404 = scmp.ne.s32.totalorder %s392, %s393
      %p405 = scmp.eq.s32.totalorder %s42, 1
      %p406 = por %p404, %p405
      %p408 = scmp.ne.s32.totalorder %s393, %s407
      %p409 = scmp.eq.s32.totalorder %s42, 0
      %p410 = por %p408, %p409
      %s412 = sadd.s32 %s411, 1
      %p415 = scmp.eq.s32.totalorder %s36, 1
      %p416 = scmp.ne.s32.totalorder %s411, %s413
      %p417 = scmp.eq.s32.totalorder %s36, 0
      %p418 = por %p416, %p417
      %p419 = scmp.ne.s32.totalorder %s411, %s413
      %p420 = scmp.eq.s32.totalorder %s41, 1
      %p421 = por %p419, %p420
      %p422 = scmp.ne.s32.totalorder %s413, %s414
      %p423 = scmp.eq.s32.totalorder %s41, 0
      %p424 = por %p422, %p423
      %p425 = scmp.ne.s32.totalorder %s413, %s414
      %p426 = scmp.eq.s32.totalorder %s42, 1
      %p427 = por %p425, %p426
      %p429 = scmp.ne.s32.totalorder %s414, %s428
      %p430 = scmp.eq.s32.totalorder %s42, 0
      %p431 = por %p429, %p430
      %s432 = ssub.s32 %s36, %s43
      %p433 = scmp.eq.s32.totalorder %s432, 0
      %s435 = sadd.s32 %s434, 1
      %s436 = scalar_select %p433, %s434, %s435
      %p439 = pneg %p433
      %p440 = scmp.eq.s32.totalorder %s36, 1
      %p441 = por %p439, %p440
      %p442 = scmp.ne.s32.totalorder %s434, %s437
      %p443 = scmp.eq.s32.totalorder %s36, 0
      %p444 = por %p442, %p443
      %p445 = scmp.ne.s32.totalorder %s434, %s437
      %p446 = scmp.eq.s32.totalorder %s41, 1
      %p447 = por %p445, %p446
      %p448 = scmp.ne.s32.totalorder %s437, %s438
      %p449 = scmp.eq.s32.totalorder %s41, 0
      %p450 = por %p448, %p449
      %p451 = scmp.ne.s32.totalorder %s437, %s438
      %p452 = scmp.eq.s32.totalorder %s42, 1
      %p453 = por %p451, %p452
      %p455 = scmp.ne.s32.totalorder %s438, %s454
      %p456 = scmp.eq.s32.totalorder %s42, 0
      %p457 = por %p455, %p456
      %p458 = scmp.le.s32.totalorder 1, %s36
      %p459 = scmp.lt.s32.totalorder %s36, 3
      %p460 = pnand %p458, %p459
      %p461 = pneg %p460
      // Predicated region
      $region9: #{tpu_custom_call.1} parent=5 // pred_check
        _
      $region10: #{tpu_custom_call.1} parent=5 // pred_check_branch
        %463 = sbr.rel (%p460) target = $region12
      $region11: #{tpu_custom_call.1} parent=5 // pred_region
        %s464 = ssub.s32 %s36, 1
        // Predicated region
        $region13: #{tpu_custom_call.1} parent=11 // pred_check
          %p465 = pneg %p109
        $region14: #{tpu_custom_call.1} parent=11 // pred_check_branch
          %467 = sbr.rel (%p465) target = $region16
        $region15: #{tpu_custom_call.1} parent=11 // pred_region
          %469 = vsyncadd [#allocation7], 0
          %s470 = sshll.u32 %s2, 4
          %s471 = int_to_ptr.hbm [resolvable:$true] %s470
          %s472 = sshll.u32 [#allocation8], 4
          %s473 = int_to_ptr.vmem [resolvable:$true] %s472
          %478 = dma.hbm_to_vmem [thread:$0]  %s471, 2048, %s473, [#allocation7], 128, 128, 8
        $region16: #{tpu_custom_call.1} parent=11 // pred_fallthru
          _
        // Predicated region
        $region17: #{tpu_custom_call.1} parent=11 // pred_check
          %p479 = pneg %p130
        $region18: #{tpu_custom_call.1} parent=11 // pred_check_branch
          %481 = sbr.rel (%p479) target = $region20
        $region19: #{tpu_custom_call.1} parent=11 // pred_region
          _
        $region20: #{tpu_custom_call.1} parent=11 // pred_fallthru
          _
        // Predicated region
        $region21: #{tpu_custom_call.1} parent=11 // pred_check
          %p482 = pneg %p151
        $region22: #{tpu_custom_call.1} parent=11 // pred_check_branch
          %484 = sbr.rel (%p482) target = $region24
        $region23: #{tpu_custom_call.1} parent=11 // pred_region
          %486 = vsyncadd [#allocation10], 0
          %s487 = sshll.u32 %s4, 4
          %s488 = int_to_ptr.hbm [resolvable:$true] %s487
          %s489 = sshll.u32 [#allocation9], 4
          %s490 = int_to_ptr.vmem [resolvable:$true] %s489
          %495 = dma.hbm_to_vmem [thread:$0]  %s488, 2048, %s490, [#allocation10], 128, 128, 8
        $region24: #{tpu_custom_call.1} parent=11 // pred_fallthru
          _
        // Predicated region
        $region25: #{tpu_custom_call.1} parent=11 // pred_check
          %p496 = pneg %p172
        $region26: #{tpu_custom_call.1} parent=11 // pred_check_branch
          %498 = sbr.rel (%p496) target = $region28
        $region27: #{tpu_custom_call.1} parent=11 // pred_region
          _
        $region28: #{tpu_custom_call.1} parent=11 // pred_fallthru
          _
        // Predicated region
        $region29: #{tpu_custom_call.1} parent=11 // pred_check
          %p499 = pneg %p193
        $region30: #{tpu_custom_call.1} parent=11 // pred_check_branch
          %501 = sbr.rel (%p499) target = $region32
        $region31: #{tpu_custom_call.1} parent=11 // pred_region
          %503 = vsyncadd [#allocation10], 0
          %s504 = sshll.u32 %s6, 4
          %s505 = int_to_ptr.hbm [resolvable:$true] %s504
          %s506 = sshll.u32 [#allocation11], 4
          %s507 = int_to_ptr.vmem [resolvable:$true] %s506
          %512 = dma.hbm_to_vmem [thread:$0]  %s505, 2048, %s507, [#allocation10], 128, 128, 8
        $region32: #{tpu_custom_call.1} parent=11 // pred_fallthru
          _
        // Predicated region
        $region33: #{tpu_custom_call.1} parent=11 // pred_check
          %p513 = pneg %p214
        $region34: #{tpu_custom_call.1} parent=11 // pred_check_branch
          %515 = sbr.rel (%p513) target = $region36
        $region35: #{tpu_custom_call.1} parent=11 // pred_region
          _
        $region36: #{tpu_custom_call.1} parent=11 // pred_fallthru
          _
        // Predicated region
        $region37: #{tpu_custom_call.1} parent=11 // pred_check
          %p516 = pneg %p235
        $region38: #{tpu_custom_call.1} parent=11 // pred_check_branch
          %518 = sbr.rel (%p516) target = $region40
        $region39: #{tpu_custom_call.1} parent=11 // pred_region
          %520 = vsyncadd [#allocation13], 0
          %s521 = sshll.u32 %s8, 4
          %s522 = int_to_ptr.hbm [resolvable:$true] %s521
          %s523 = sshll.u32 [#allocation12], 4
          %s524 = int_to_ptr.vmem [resolvable:$true] %s523
          %529 = dma.hbm_to_vmem [thread:$0]  %s522, 2048, %s524, [#allocation13], 128, 128, 8
        $region40: #{tpu_custom_call.1} parent=11 // pred_fallthru
          _
        // Predicated region
        $region41: #{tpu_custom_call.1} parent=11 // pred_check
          %p530 = pneg %p256
        $region42: #{tpu_custom_call.1} parent=11 // pred_check_branch
          %532 = sbr.rel (%p530) target = $region44
        $region43: #{tpu_custom_call.1} parent=11 // pred_region
          _
        $region44: #{tpu_custom_call.1} parent=11 // pred_fallthru
          _
        // Predicated region
        $region45: #{tpu_custom_call.1} parent=11 // pred_check
          %p533 = pneg %p277
        $region46: #{tpu_custom_call.1} parent=11 // pred_check_branch
          %535 = sbr.rel (%p533) target = $region48
        $region47: #{tpu_custom_call.1} parent=11 // pred_region
          _
        $region48: #{tpu_custom_call.1} parent=11 // pred_fallthru
          _
        // Predicated region
        $region49: #{tpu_custom_call.1} parent=11 // pred_check
          %p536 = pneg %p298
        $region50: #{tpu_custom_call.1} parent=11 // pred_check_branch
          %538 = sbr.rel (%p536) target = $region52
        $region51: #{tpu_custom_call.1} parent=11 // pred_region
          _
        $region52: #{tpu_custom_call.1} parent=11 // pred_fallthru
          _
        // Predicated region
        $region53: #{tpu_custom_call.1} parent=11 // pred_check
          %p539 = pneg %p319
        $region54: #{tpu_custom_call.1} parent=11 // pred_check_branch
          %541 = sbr.rel (%p539) target = $region56
        $region55: #{tpu_custom_call.1} parent=11 // pred_region
          %543 = vsyncadd [#allocation13], 0
          %s544 = sshll.u32 %s12, 4
          %s545 = int_to_ptr.hbm [resolvable:$true] %s544
          %s546 = sshll.u32 [#allocation14], 4
          %s547 = int_to_ptr.vmem [resolvable:$true] %s546
          %552 = dma.hbm_to_vmem [thread:$0]  %s545, 4096, %s547, [#allocation13], 256, 256, 16
        $region56: #{tpu_custom_call.1} parent=11 // pred_fallthru
          _
        // Predicated region
        $region57: #{tpu_custom_call.1} parent=11 // pred_check
          %p553 = pneg %p340
        $region58: #{tpu_custom_call.1} parent=11 // pred_check_branch
          %555 = sbr.rel (%p553) target = $region60
        $region59: #{tpu_custom_call.1} parent=11 // pred_region
          _
        $region60: #{tpu_custom_call.1} parent=11 // pred_fallthru
          _
        // Predicated region
        $region61: #{tpu_custom_call.1} parent=11 // pred_check
          %p556 = pneg %p361
        $region62: #{tpu_custom_call.1} parent=11 // pred_check_branch
          %558 = sbr.rel (%p556) target = $region64
        $region63: #{tpu_custom_call.1} parent=11 // pred_region
          %560 = vsyncadd [#allocation16], 0
          %s561 = sshll.u32 %s14, 4
          %s562 = int_to_ptr.hbm [resolvable:$true] %s561
          %s563 = sshll.u32 [#allocation15], 4
          %s564 = int_to_ptr.vmem [resolvable:$true] %s563
          %569 = dma.hbm_to_vmem [thread:$0]  %s562, 4096, %s564, [#allocation16], 128, 128, 8
        $region64: #{tpu_custom_call.1} parent=11 // pred_fallthru
          _
        // Predicated region
        $region65: #{tpu_custom_call.1} parent=11 // pred_check
          %p570 = pneg %p382
        $region66: #{tpu_custom_call.1} parent=11 // pred_check_branch
          %572 = sbr.rel (%p570) target = $region68
        $region67: #{tpu_custom_call.1} parent=11 // pred_region
          _
        $region68: #{tpu_custom_call.1} parent=11 // pred_fallthru
          _
        // Predicated region
        $region69: #{tpu_custom_call.1} parent=11 // pred_check
          %p573 = pneg %p403
        $region70: #{tpu_custom_call.1} parent=11 // pred_check_branch
          %575 = sbr.rel (%p573) target = $region72
        $region71: #{tpu_custom_call.1} parent=11 // pred_region
          _
        $region72: #{tpu_custom_call.1} parent=11 // pred_fallthru
          _
        // Predicated region
        $region73: #{tpu_custom_call.1} parent=11 // pred_check
          %p576 = pneg %p424
        $region74: #{tpu_custom_call.1} parent=11 // pred_check_branch
          %578 = sbr.rel (%p576) target = $region76
        $region75: #{tpu_custom_call.1} parent=11 // pred_region
          _
        $region76: #{tpu_custom_call.1} parent=11 // pred_fallthru
          _
      $region12: #{tpu_custom_call.1} parent=5 // pred_fallthru
        _
      %p579 = scmp.lt.s32.totalorder %s36, 2
      // Predicated region
      $region77: #{tpu_custom_call.1} parent=5 // pred_check
        %p580 = pneg %p579
      $region78: #{tpu_custom_call.1} parent=5 // pred_check_branch
        %582 = sbr.rel (%p580) target = $region80
      $region79: #{tpu_custom_call.1} parent=5 // pred_region
        // Predicated region
        $region81: #{tpu_custom_call.1} parent=79 // pred_check
          %p583 = pneg %p56
        $region82: #{tpu_custom_call.1} parent=79 // pred_check_branch
          %585 = sbr.rel (%p583) target = $region84
        $region83: #{tpu_custom_call.1} parent=79 // pred_region
          %s586 = sand.u32 %s46, 1
          %s587 = scalar_lea.sflag [#allocation4], %s586
          %s588 = sand.u32 %s46, 1
          %s589 = smul.addr %s588, 16
          %s590 = scalar_lea.vmem [#allocation3], %s589
          %s591 = smul.u32 2, %s36
          %593 = vsyncadd %s587, 0
          %s594 = smul.addr %s591, 8
          %s595 = scalar_lea.hbm %s0, %s594
          %s596 = sshll.u32 %s595, 4
          %s597 = int_to_ptr.hbm [resolvable:$true] %s596
          %s598 = sshll.u32 %s590, 4
          %s599 = int_to_ptr.vmem [resolvable:$true] %s598
          %604 = dma.hbm_to_vmem [thread:$0]  %s597, 256, %s599, %s587, 128, 128, 8
        $region84: #{tpu_custom_call.1} parent=79 // pred_fallthru
          _
        // Predicated region
        $region85: #{tpu_custom_call.1} parent=79 // pred_check
          %p605 = pneg %p82
        $region86: #{tpu_custom_call.1} parent=79 // pred_check_branch
          %607 = sbr.rel (%p605) target = $region88
        $region87: #{tpu_custom_call.1} parent=79 // pred_region
          %s608 = sand.u32 %s36, 1
          %s609 = scalar_lea.sflag [#allocation7], %s608
          %s610 = sand.u32 %s72, 1
          %s611 = smul.addr %s610, 2
          %s612 = scalar_lea.vmem [#allocation6], %s611
          %s613 = smul.u32 2, %s36
          %615 = vsyncadd %s609, 0
          %s616 = scalar_lea.hbm %s1, %s613
          %s617 = sshll.u32 %s616, 4
          %s618 = int_to_ptr.hbm [resolvable:$true] %s617
          %s619 = sshll.u32 %s612, 4
          %s620 = int_to_ptr.vmem [resolvable:$true] %s619
          %625 = dma.hbm_to_vmem [thread:$0]  %s618, 32, %s620, %s609, 16, 16, 1
        $region88: #{tpu_custom_call.1} parent=79 // pred_fallthru
          _
      $region80: #{tpu_custom_call.1} parent=5 // pred_fallthru
        _
      %p626 = scmp.le.s32.totalorder 1, %s36
      %p627 = scmp.lt.s32.totalorder %s36, 3
      %p628 = pnand %p626, %p627
      %p629 = pneg %p628
      // Predicated region
      $region89: #{tpu_custom_call.1} parent=5 // pred_check
        _
      $region90: #{tpu_custom_call.1} parent=5 // pred_check_branch
        %631 = sbr.rel (%p628) target = $region92
      $region91: #{tpu_custom_call.1} parent=5 // pred_region
        %s632 = ssub.s32 %s36, 1
        %s633 = sand.u32 %s49, 1
        %s634 = scalar_lea.sflag [#allocation4], %s633
        %s635 = sand.u32 %s49, 1
        %s636 = smul.addr %s635, 16
        %s637 = scalar_lea.vmem [#allocation3], %s636
        // Predicated region
        $region93: #{tpu_custom_call.1} parent=91 // pred_check
          %p638 = pneg %p62
        $region94: #{tpu_custom_call.1} parent=91 // pred_check_branch
          %640 = sbr.rel (%p638) target = $region96
        $region95: #{tpu_custom_call.1} parent=91 // pred_region
          %642 = dma.done %s634, 256
        $region96: #{tpu_custom_call.1} parent=91 // pred_fallthru
          _
        %s643 = sand.u32 %s41, 1
        %s644 = scalar_lea.sflag [#allocation7], %s643
        %s645 = sand.u32 %s75, 1
        %s646 = smul.addr %s645, 2
        %s647 = scalar_lea.vmem [#allocation6], %s646
        // Predicated region
        $region97: #{tpu_custom_call.1} parent=91 // pred_check
          %p648 = pneg %p88
        $region98: #{tpu_custom_call.1} parent=91 // pred_check_branch
          %650 = sbr.rel (%p648) target = $region100
        $region99: #{tpu_custom_call.1} parent=91 // pred_region
          %652 = dma.done %s644, 32
        $region100: #{tpu_custom_call.1} parent=91 // pred_fallthru
          _
        // Predicated region
        $region101: #{tpu_custom_call.1} parent=91 // pred_check
          %p653 = pneg %p109
        $region102: #{tpu_custom_call.1} parent=91 // pred_check_branch
          %655 = sbr.rel (%p653) target = $region104
        $region103: #{tpu_custom_call.1} parent=91 // pred_region
          %657 = dma.done [#allocation7], 2048
        $region104: #{tpu_custom_call.1} parent=91 // pred_fallthru
          _
        // Predicated region
        $region105: #{tpu_custom_call.1} parent=91 // pred_check
          %p658 = pneg %p151
        $region106: #{tpu_custom_call.1} parent=91 // pred_check_branch
          %660 = sbr.rel (%p658) target = $region108
        $region107: #{tpu_custom_call.1} parent=91 // pred_region
          %662 = dma.done [#allocation10], 2048
        $region108: #{tpu_custom_call.1} parent=91 // pred_fallthru
          _
        // Predicated region
        $region109: #{tpu_custom_call.1} parent=91 // pred_check
          %p663 = pneg %p193
        $region110: #{tpu_custom_call.1} parent=91 // pred_check_branch
          %665 = sbr.rel (%p663) target = $region112
        $region111: #{tpu_custom_call.1} parent=91 // pred_region
          %667 = dma.done [#allocation10], 2048
        $region112: #{tpu_custom_call.1} parent=91 // pred_fallthru
          _
        // Predicated region
        $region113: #{tpu_custom_call.1} parent=91 // pred_check
          %p668 = pneg %p235
        $region114: #{tpu_custom_call.1} parent=91 // pred_check_branch
          %670 = sbr.rel (%p668) target = $region116
        $region115: #{tpu_custom_call.1} parent=91 // pred_region
          %672 = dma.done [#allocation13], 2048
        $region116: #{tpu_custom_call.1} parent=91 // pred_fallthru
          _
        // Predicated region
        $region117: #{tpu_custom_call.1} parent=91 // pred_check
          %p673 = pneg %p319
        $region118: #{tpu_custom_call.1} parent=91 // pred_check_branch
          %675 = sbr.rel (%p673) target = $region120
        $region119: #{tpu_custom_call.1} parent=91 // pred_region
          %677 = dma.done [#allocation13], 4096
        $region120: #{tpu_custom_call.1} parent=91 // pred_fallthru
          _
        // Predicated region
        $region121: #{tpu_custom_call.1} parent=91 // pred_check
          %p678 = pneg %p361
        $region122: #{tpu_custom_call.1} parent=91 // pred_check_branch
          %680 = sbr.rel (%p678) target = $region124
        $region123: #{tpu_custom_call.1} parent=91 // pred_region
          %682 = dma.done [#allocation16], 4096
        $region124: #{tpu_custom_call.1} parent=91 // pred_fallthru
          _
        %s683 = sand.u32 %s49, 1
        %s684 = scalar_lea.sflag [#allocation4], %s683
        %s685 = sand.u32 %s49, 1
        %s686 = smul.addr %s685, 16
        %s687 = scalar_lea.vmem [#allocation3], %s686
        %p688 = pneg %p62
        %p689 = pneg %p59
        %s690 = sand.u32 %s41, 1
        %s691 = scalar_lea.sflag [#allocation7], %s690
        %s692 = sand.u32 %s75, 1
        %s693 = smul.addr %s692, 2
        %s694 = scalar_lea.vmem [#allocation6], %s693
        %p695 = pneg %p88
        %p696 = pneg %p85
        %p697 = pneg %p109
        %p698 = pneg %p106
        %p699 = pneg %p130
        %p700 = pneg %p127
        %p701 = pneg %p151
        %p702 = pneg %p148
        %p703 = pneg %p172
        %p704 = pneg %p169
        %p705 = pneg %p193
        %p706 = pneg %p190
        %p707 = pneg %p214
        %p708 = pneg %p211
        %p709 = pneg %p235
        %p710 = pneg %p232
        %p711 = pneg %p256
        %p712 = pneg %p253
        %p713 = pneg %p277
        %p714 = pneg %p274
        %p715 = pneg %p298
        %p716 = pneg %p295
        %p717 = pneg %p319
        %p718 = pneg %p316
        %p719 = pneg %p340
        %p720 = pneg %p337
        %p721 = pneg %p361
        %p722 = pneg %p358
        %p723 = pneg %p382
        %p724 = pneg %p379
        %p725 = pneg %p403
        %p726 = pneg %p400
        %p727 = pneg %p424
        %p728 = pneg %p421
        %p729 = pneg %p450
        %p730 = pneg %p447
        %s731 = sand.u32 %s437, 1
        %s732 = scalar_lea.sflag [#allocation5], %s731
        %s733 = sand.u32 %s437, 1
        %s734 = smul.addr %s733, 16
        %s735 = scalar_lea.vmem [#allocation17], %s734
        %s736 = smul.u32 2, %s41
        %s737 = smul.u32 2, %s41
        %s738 = smul.u32 2, %s41
        %v739 = vld [vmem:[%s637] sm:$0xff]
        %v740 = vld [vmem:[%s637 + $0x8] sm:$0xff]
        %v741 = vld [vmem:[#allocation8] sm:$0xff]
        %v742 = vld [vmem:[#allocation8 + $0x8] sm:$0xff]
        %v743 = vld [vmem:[#allocation8 + $0x10] sm:$0xff]
        %v744 = vld [vmem:[#allocation8 + $0x18] sm:$0xff]
        %v745 = vld [vmem:[#allocation8 + $0x20] sm:$0xff]
        %v746 = vld [vmem:[#allocation8 + $0x28] sm:$0xff]
        %v747 = vld [vmem:[#allocation8 + $0x30] sm:$0xff]
        %v748 = vld [vmem:[#allocation8 + $0x38] sm:$0xff]
        %v749 = vld [vmem:[#allocation8 + $0x40] sm:$0xff]
        %v750 = vld [vmem:[#allocation8 + $0x48] sm:$0xff]
        %v751 = vld [vmem:[#allocation8 + $0x50] sm:$0xff]
        %v752 = vld [vmem:[#allocation8 + $0x58] sm:$0xff]
        %v753 = vld [vmem:[#allocation8 + $0x60] sm:$0xff]
        %v754 = vld [vmem:[#allocation8 + $0x68] sm:$0xff]
        %v755 = vld [vmem:[#allocation8 + $0x70] sm:$0xff]
        %v756 = vld [vmem:[#allocation8 + $0x78] sm:$0xff]
        %v757 = vld [vmem:[%s3] sm:$0x1]
        %v759 = vperm.slane %v757, 0
        %761 = vmatpush.msra.mxu0 %v756
        %762 = vmatpush.msra.mxu0 %v755
        %763 = vmatpush.msra.mxu0 %v754
        %764 = vmatpush.msra.mxu0 %v753
        %765 = vmatpush.msra.mxu0 %v752
        %766 = vmatpush.msra.mxu0 %v751
        %767 = vmatpush.msra.mxu0 %v750
        %768 = vmatpush.msra.mxu0 %v749
        %769 = vmatpush.msra.mxu0 %v748
        %770 = vmatpush.msra.mxu0 %v747
        %771 = vmatpush.msra.mxu0 %v746
        %772 = vmatpush.msra.mxu0 %v745
        %773 = vmatpush.msra.mxu0 %v744
        %774 = vmatpush.msra.mxu0 %v743
        %775 = vmatpush.msra.mxu0 %v742
        %776 = vmatpush.msra.mxu0 %v741
        %777 = vmatmul.f32.gmra.mxu0 %v739
        %v778 = vpop.f32.mrf.mxu0
        %v779 = vadd.f32 %v759, %v778
        %780 = vmatmul.f32.gmra.mxu0 %v740
        %v781 = vpop.f32.mrf.mxu0
        %v782 = vadd.f32 %v759, %v781
        %783 = vdwg.mxu0
        %v784 = vmul.f32 %v779, 0.17677669
        %v785 = vmul.f32 %v782, 0.17677669
        %v786 = vld [vmem:[#allocation9] sm:$0xff]
        %v787 = vld [vmem:[#allocation9 + $0x8] sm:$0xff]
        %v788 = vld [vmem:[#allocation9 + $0x10] sm:$0xff]
        %v789 = vld [vmem:[#allocation9 + $0x18] sm:$0xff]
        %v790 = vld [vmem:[#allocation9 + $0x20] sm:$0xff]
        %v791 = vld [vmem:[#allocation9 + $0x28] sm:$0xff]
        %v792 = vld [vmem:[#allocation9 + $0x30] sm:$0xff]
        %v793 = vld [vmem:[#allocation9 + $0x38] sm:$0xff]
        %v794 = vld [vmem:[#allocation9 + $0x40] sm:$0xff]
        %v795 = vld [vmem:[#allocation9 + $0x48] sm:$0xff]
        %v796 = vld [vmem:[#allocation9 + $0x50] sm:$0xff]
        %v797 = vld [vmem:[#allocation9 + $0x58] sm:$0xff]
        %v798 = vld [vmem:[#allocation9 + $0x60] sm:$0xff]
        %v799 = vld [vmem:[#allocation9 + $0x68] sm:$0xff]
        %v800 = vld [vmem:[#allocation9 + $0x70] sm:$0xff]
        %v801 = vld [vmem:[#allocation9 + $0x78] sm:$0xff]
        %v802 = vld [vmem:[%s5] sm:$0x1]
        %v804 = vperm.slane %v802, 0
        %806 = vmatpush.msra.mxu0 %v801
        %807 = vmatpush.msra.mxu0 %v800
        %808 = vmatpush.msra.mxu0 %v799
        %809 = vmatpush.msra.mxu0 %v798
        %810 = vmatpush.msra.mxu0 %v797
        %811 = vmatpush.msra.mxu0 %v796
        %812 = vmatpush.msra.mxu0 %v795
        %813 = vmatpush.msra.mxu0 %v794
        %814 = vmatpush.msra.mxu0 %v793
        %815 = vmatpush.msra.mxu0 %v792
        %816 = vmatpush.msra.mxu0 %v791
        %817 = vmatpush.msra.mxu0 %v790
        %818 = vmatpush.msra.mxu0 %v789
        %819 = vmatpush.msra.mxu0 %v788
        %820 = vmatpush.msra.mxu0 %v787
        %821 = vmatpush.msra.mxu0 %v786
        %822 = vmatmul.f32.gmra.mxu0 %v739
        %v823 = vpop.f32.mrf.mxu0
        %v824 = vadd.f32 %v804, %v823
        %825 = vmatmul.f32.gmra.mxu0 %v740
        %v826 = vpop.f32.mrf.mxu0
        %v827 = vadd.f32 %v804, %v826
        %828 = vdwg.mxu0
        %v829 = vld [vmem:[#allocation11] sm:$0xff]
        %v830 = vld [vmem:[#allocation11 + $0x8] sm:$0xff]
        %v831 = vld [vmem:[#allocation11 + $0x10] sm:$0xff]
        %v832 = vld [vmem:[#allocation11 + $0x18] sm:$0xff]
        %v833 = vld [vmem:[#allocation11 + $0x20] sm:$0xff]
        %v834 = vld [vmem:[#allocation11 + $0x28] sm:$0xff]
        %v835 = vld [vmem:[#allocation11 + $0x30] sm:$0xff]
        %v836 = vld [vmem:[#allocation11 + $0x38] sm:$0xff]
        %v837 = vld [vmem:[#allocation11 + $0x40] sm:$0xff]
        %v838 = vld [vmem:[#allocation11 + $0x48] sm:$0xff]
        %v839 = vld [vmem:[#allocation11 + $0x50] sm:$0xff]
        %v840 = vld [vmem:[#allocation11 + $0x58] sm:$0xff]
        %v841 = vld [vmem:[#allocation11 + $0x60] sm:$0xff]
        %v842 = vld [vmem:[#allocation11 + $0x68] sm:$0xff]
        %v843 = vld [vmem:[#allocation11 + $0x70] sm:$0xff]
        %v844 = vld [vmem:[#allocation11 + $0x78] sm:$0xff]
        %v845 = vld [vmem:[%s7] sm:$0x1]
        %v847 = vperm.slane %v845, 0
        %849 = vmatpush.msra.mxu0 %v844
        %850 = vmatpush.msra.mxu0 %v843
        %851 = vmatpush.msra.mxu0 %v842
        %852 = vmatpush.msra.mxu0 %v841
        %853 = vmatpush.msra.mxu0 %v840
        %854 = vmatpush.msra.mxu0 %v839
        %855 = vmatpush.msra.mxu0 %v838
        %856 = vmatpush.msra.mxu0 %v837
        %857 = vmatpush.msra.mxu0 %v836
        %858 = vmatpush.msra.mxu0 %v835
        %859 = vmatpush.msra.mxu0 %v834
        %860 = vmatpush.msra.mxu0 %v833
        %861 = vmatpush.msra.mxu0 %v832
        %862 = vmatpush.msra.mxu0 %v831
        %863 = vmatpush.msra.mxu0 %v830
        %864 = vmatpush.msra.mxu0 %v829
        %865 = vmatmul.f32.gmra.mxu0 %v739
        %v866 = vpop.f32.mrf.mxu0
        %v867 = vadd.f32 %v847, %v866
        %868 = vmatmul.f32.gmra.mxu0 %v740
        %v869 = vpop.f32.mrf.mxu0
        %v870 = vadd.f32 %v847, %v869
        %871 = vdwg.mxu0
        %v872 = vld [vmem:[%s647] sm:$0x1]
        %v873 = vld [vmem:[%s647 + $0x1] sm:$0x1]
        %vm874 = vcmp.eq.f32.partialorder %v872, 0.0
        %vm875 = vcmp.eq.f32.partialorder %v873, 0.0
        %vm876 = vcmask 261120
        %v878 = vsel %vm876, %v784, 0
        %v881 = vsel %vm876, %v824, 0
        %883 = vmatpush.xpose.msra.mxu0 0.0
        %884 = vmatpush.xpose.msra.mxu0 0.0
        %885 = vmatpush.xpose.msra.mxu0 0.0
        %886 = vmatpush.xpose.msra.mxu0 0.0
        %887 = vmatpush.xpose.msra.mxu0 0.0
        %888 = vmatpush.xpose.msra.mxu0 0.0
        %889 = vmatpush.xpose.msra.mxu0 0.0
        %890 = vmatpush.xpose.msra.mxu0 0.0
        %891 = vmatpush.xpose.msra.mxu0 0.0
        %892 = vmatpush.xpose.msra.mxu0 0.0
        %893 = vmatpush.xpose.msra.mxu0 0.0
        %894 = vmatpush.xpose.msra.mxu0 0.0
        %895 = vmatpush.xpose.msra.mxu0 0.0
        %896 = vmatpush.xpose.msra.mxu0 0.0
        %897 = vmatpush.xpose.msra.mxu0 0.0
        %898 = vmatpush.xpose.msra.mxu0 %v881
        %899 = vmatmul.f32.gmra.mxu0 %v878
        %v900 = vpop.f32.mrf.mxu0
        %v901 = vadd.f32 0.0, %v900
        %902 = vdwg.mxu0
        %v904 = vsel %vm876, %v785, 0
        %v907 = vsel %vm876, %v827, 0
        %909 = vmatpush.xpose.msra.mxu0 0.0
        %910 = vmatpush.xpose.msra.mxu0 0.0
        %911 = vmatpush.xpose.msra.mxu0 0.0
        %912 = vmatpush.xpose.msra.mxu0 0.0
        %913 = vmatpush.xpose.msra.mxu0 0.0
        %914 = vmatpush.xpose.msra.mxu0 0.0
        %915 = vmatpush.xpose.msra.mxu0 0.0
        %916 = vmatpush.xpose.msra.mxu0 0.0
        %917 = vmatpush.xpose.msra.mxu0 0.0
        %918 = vmatpush.xpose.msra.mxu0 0.0
        %919 = vmatpush.xpose.msra.mxu0 0.0
        %920 = vmatpush.xpose.msra.mxu0 0.0
        %921 = vmatpush.xpose.msra.mxu0 0.0
        %922 = vmatpush.xpose.msra.mxu0 0.0
        %923 = vmatpush.xpose.msra.mxu0 0.0
        %924 = vmatpush.xpose.msra.mxu0 %v907
        %925 = vmatmul.f32.gmra.mxu0 %v904
        %v926 = vpop.f32.mrf.mxu0
        %v927 = vadd.f32 0.0, %v926
        %928 = vdwg.mxu0
        %v929 = vsel %vm874, 1, 0
        %v930 = vsel %vm875, 1, 0
        %v931 = vperm.slane %v929, 0
        %v932 = vperm.slane %v930, 0
        %vm933 = vcmp.eq.s32.totalorder %v931, 1
        %vm934 = vcmp.eq.s32.totalorder %v932, 1
        %v935 = vsel %vm933, -10000.0, %v901
        %v936 = vsel %vm934, -10000.0, %v927
        %vm937 = vcmask 64512
        %v938 = vsel %vm937, %v935, -inf
        %939 = vmax.xlane.f32.xlu0 %v938
        %v940 = vpop.xlane.xlu0 %939
        %v941 = vsel %vm937, %v936, -inf
        %942 = vmax.xlane.f32.xlu0 %v941
        %v943 = vpop.xlane.xlu0 %942
        %v944 = vsub.f32 %v935, %v940
        %v945 = vsub.f32 %v936, %v943
        %v946 = vmul.f32 %v944, 1.442695
        %v947 = vpow.pop %v946
        %v948 = vmul.f32 %v945, 1.442695
        %v949 = vpow.pop %v948
        %v950 = vsel %vm937, %v947, 0.0
        %951 = vadd.xlane.f32.xlu0 %v950
        %v952 = vpop.xlane.xlu0 %951
        %v953 = vsel %vm937, %v949, 0.0
        %954 = vadd.xlane.f32.xlu0 %v953
        %v955 = vpop.xlane.xlu0 %954
        %v956 = vrcp.pop %v952
        %v957 = vmul.f32 %v952, %v956
        %v958 = vsub.f32 1.0, %v957
        %v959 = vmul.f32 %v956, %v958
        %v960 = vadd.f32 %v956, %v959
        %vm961 = vweird.f32 %v952
        %vm962 = vweird.f32 %v956
        %vm963 = vmor %vm961, %vm962
        %v964 = vsel %vm963, %v956, %v960
        %v965 = vand.u32 2147483647, %v952
        %vm966 = vcmp.eq.f32.partialorder %v965, 8.507059e+37
        %v967 = vand.u32 %v952, 2147483648
        %v968 = vor.u32 1.1754944e-38, %v967
        %v969 = vsel %vm966, %v968, %v964
        %v970 = vrcp.pop %v955
        %v971 = vmul.f32 %v955, %v970
        %v972 = vsub.f32 1.0, %v971
        %v973 = vmul.f32 %v970, %v972
        %v974 = vadd.f32 %v970, %v973
        %vm975 = vweird.f32 %v955
        %vm976 = vweird.f32 %v970
        %vm977 = vmor %vm975, %vm976
        %v978 = vsel %vm977, %v970, %v974
        %v979 = vand.u32 2147483647, %v955
        %vm980 = vcmp.eq.f32.partialorder %v979, 8.507059e+37
        %v981 = vand.u32 %v955, 2147483648
        %v982 = vor.u32 1.1754944e-38, %v981
        %v983 = vsel %vm980, %v982, %v978
        %v984 = vmul.f32 %v947, %v969
        %v985 = vmul.f32 %v949, %v983
        %v987 = vsel %vm937, %v984, 0
        %989 = vmatpush.msra.mxu0 0.0
        %990 = vmatpush.msra.mxu0 0.0
        %991 = vmatpush.msra.mxu0 0.0
        %992 = vmatpush.msra.mxu0 0.0
        %993 = vmatpush.msra.mxu0 0.0
        %994 = vmatpush.msra.mxu0 0.0
        %995 = vmatpush.msra.mxu0 0.0
        %996 = vmatpush.msra.mxu0 0.0
        %997 = vmatpush.msra.mxu0 0.0
        %998 = vmatpush.msra.mxu0 0.0
        %999 = vmatpush.msra.mxu0 0.0
        %1000 = vmatpush.msra.mxu0 0.0
        %1001 = vmatpush.msra.mxu0 0.0
        %1002 = vmatpush.msra.mxu0 0.0
        %1003 = vmatpush.msra.mxu0 0.0
        %1004 = vmatpush.msra.mxu0 %v867
        %1005 = vmatmul.f32.gmra.mxu0 %v987
        %v1006 = vpop.f32.mrf.mxu0
        %v1007 = vadd.f32 0.0, %v1006
        %1008 = vdwg.mxu0
        %v1010 = vsel %vm937, %v985, 0
        %1012 = vmatpush.msra.mxu0 0.0
        %1013 = vmatpush.msra.mxu0 0.0
        %1014 = vmatpush.msra.mxu0 0.0
        %1015 = vmatpush.msra.mxu0 0.0
        %1016 = vmatpush.msra.mxu0 0.0
        %1017 = vmatpush.msra.mxu0 0.0
        %1018 = vmatpush.msra.mxu0 0.0
        %1019 = vmatpush.msra.mxu0 0.0
        %1020 = vmatpush.msra.mxu0 0.0
        %1021 = vmatpush.msra.mxu0 0.0
        %1022 = vmatpush.msra.mxu0 0.0
        %1023 = vmatpush.msra.mxu0 0.0
        %1024 = vmatpush.msra.mxu0 0.0
        %1025 = vmatpush.msra.mxu0 0.0
        %1026 = vmatpush.msra.mxu0 0.0
        %1027 = vmatpush.msra.mxu0 %v870
        %1028 = vmatmul.f32.gmra.mxu0 %v1010
        %v1029 = vpop.f32.mrf.mxu0
        %v1030 = vadd.f32 0.0, %v1029
        %1031 = vdwg.mxu0
        %1032 = vst.msk [vmem:[#allocation2] sm:$0xff] %vm876, %v1007
        %1033 = vst.msk [vmem:[#allocation2 + $0x8] sm:$0xff] %vm876, %v1030
        %1034 = vrot.lane.b32.xlu0 %v784, 96
        %v1035 = vpop.permute.xlu0 %1034
        %1036 = vrot.lane.b32.xlu0 %v824, 96
        %v1037 = vpop.permute.xlu0 %1036
        %v1038 = vsel %vm876, %v1035, 0
        %v1040 = vsel %vm876, %v1037, 0
        %1042 = vmatpush.xpose.msra.mxu0 0.0
        %1043 = vmatpush.xpose.msra.mxu0 0.0
        %1044 = vmatpush.xpose.msra.mxu0 0.0
        %1045 = vmatpush.xpose.msra.mxu0 0.0
        %1046 = vmatpush.xpose.msra.mxu0 0.0
        %1047 = vmatpush.xpose.msra.mxu0 0.0
        %1048 = vmatpush.xpose.msra.mxu0 0.0
        %1049 = vmatpush.xpose.msra.mxu0 0.0
        %1050 = vmatpush.xpose.msra.mxu0 0.0
        %1051 = vmatpush.xpose.msra.mxu0 0.0
        %1052 = vmatpush.xpose.msra.mxu0 0.0
        %1053 = vmatpush.xpose.msra.mxu0 0.0
        %1054 = vmatpush.xpose.msra.mxu0 0.0
        %1055 = vmatpush.xpose.msra.mxu0 0.0
        %1056 = vmatpush.xpose.msra.mxu0 0.0
        %1057 = vmatpush.xpose.msra.mxu0 %v1040
        %1058 = vmatmul.f32.gmra.mxu0 %v1038
        %v1059 = vpop.f32.mrf.mxu0
        %v1060 = vadd.f32 0.0, %v1059
        %1061 = vdwg.mxu0
        %1062 = vrot.lane.b32.xlu0 %v785, 96
        %v1063 = vpop.permute.xlu0 %1062
        %1064 = vrot.lane.b32.xlu0 %v827, 96
        %v1065 = vpop.permute.xlu0 %1064
        %v1066 = vsel %vm876, %v1063, 0
        %v1068 = vsel %vm876, %v1065, 0
        %1070 = vmatpush.xpose.msra.mxu0 0.0
        %1071 = vmatpush.xpose.msra.mxu0 0.0
        %1072 = vmatpush.xpose.msra.mxu0 0.0
        %1073 = vmatpush.xpose.msra.mxu0 0.0
        %1074 = vmatpush.xpose.msra.mxu0 0.0
        %1075 = vmatpush.xpose.msra.mxu0 0.0
        %1076 = vmatpush.xpose.msra.mxu0 0.0
        %1077 = vmatpush.xpose.msra.mxu0 0.0
        %1078 = vmatpush.xpose.msra.mxu0 0.0
        %1079 = vmatpush.xpose.msra.mxu0 0.0
        %1080 = vmatpush.xpose.msra.mxu0 0.0
        %1081 = vmatpush.xpose.msra.mxu0 0.0
        %1082 = vmatpush.xpose.msra.mxu0 0.0
        %1083 = vmatpush.xpose.msra.mxu0 0.0
        %1084 = vmatpush.xpose.msra.mxu0 0.0
        %1085 = vmatpush.xpose.msra.mxu0 %v1068
        %1086 = vmatmul.f32.gmra.mxu0 %v1066
        %v1087 = vpop.f32.mrf.mxu0
        %v1088 = vadd.f32 0.0, %v1087
        %1089 = vdwg.mxu0
        %v1090 = vsel %vm933, -10000.0, %v1060
        %v1091 = vsel %vm934, -10000.0, %v1088
        %v1092 = vsel %vm937, %v1090, -inf
        %1093 = vmax.xlane.f32.xlu0 %v1092
        %v1094 = vpop.xlane.xlu0 %1093
        %v1095 = vsel %vm937, %v1091, -inf
        %1096 = vmax.xlane.f32.xlu0 %v1095
        %v1097 = vpop.xlane.xlu0 %1096
        %v1098 = vsub.f32 %v1090, %v1094
        %v1099 = vsub.f32 %v1091, %v1097
        %v1100 = vmul.f32 %v1098, 1.442695
        %v1101 = vpow.pop %v1100
        %v1102 = vmul.f32 %v1099, 1.442695
        %v1103 = vpow.pop %v1102
        %v1104 = vsel %vm937, %v1101, 0.0
        %1105 = vadd.xlane.f32.xlu0 %v1104
        %v1106 = vpop.xlane.xlu0 %1105
        %v1107 = vsel %vm937, %v1103, 0.0
        %1108 = vadd.xlane.f32.xlu0 %v1107
        %v1109 = vpop.xlane.xlu0 %1108
        %v1110 = vrcp.pop %v1106
        %v1111 = vmul.f32 %v1106, %v1110
        %v1112 = vsub.f32 1.0, %v1111
        %v1113 = vmul.f32 %v1110, %v1112
        %v1114 = vadd.f32 %v1110, %v1113
        %vm1115 = vweird.f32 %v1106
        %vm1116 = vweird.f32 %v1110
        %vm1117 = vmor %vm1115, %vm1116
        %v1118 = vsel %vm1117, %v1110, %v1114
        %v1119 = vand.u32 2147483647, %v1106
        %vm1120 = vcmp.eq.f32.partialorder %v1119, 8.507059e+37
        %v1121 = vand.u32 %v1106, 2147483648
        %v1122 = vor.u32 1.1754944e-38, %v1121
        %v1123 = vsel %vm1120, %v1122, %v1118
        %v1124 = vrcp.pop %v1109
        %v1125 = vmul.f32 %v1109, %v1124
        %v1126 = vsub.f32 1.0, %v1125
        %v1127 = vmul.f32 %v1124, %v1126
        %v1128 = vadd.f32 %v1124, %v1127
        %vm1129 = vweird.f32 %v1109
        %vm1130 = vweird.f32 %v1124
        %vm1131 = vmor %vm1129, %vm1130
        %v1132 = vsel %vm1131, %v1124, %v1128
        %v1133 = vand.u32 2147483647, %v1109
        %vm1134 = vcmp.eq.f32.partialorder %v1133, 8.507059e+37
        %v1135 = vand.u32 %v1109, 2147483648
        %v1136 = vor.u32 1.1754944e-38, %v1135
        %v1137 = vsel %vm1134, %v1136, %v1132
        %v1138 = vmul.f32 %v1101, %v1123
        %v1139 = vmul.f32 %v1103, %v1137
        %1141 = vrot.lane.b32.xlu0 %v867, 96
        %v1142 = vpop.permute.xlu0 %1141
        %v1145 = vsel %vm937, %v1138, 0
        %1147 = vmatpush.msra.mxu0 0.0
        %1148 = vmatpush.msra.mxu0 0.0
        %1149 = vmatpush.msra.mxu0 0.0
        %1150 = vmatpush.msra.mxu0 0.0
        %1151 = vmatpush.msra.mxu0 0.0
        %1152 = vmatpush.msra.mxu0 0.0
        %1153 = vmatpush.msra.mxu0 0.0
        %1154 = vmatpush.msra.mxu0 0.0
        %1155 = vmatpush.msra.mxu0 0.0
        %1156 = vmatpush.msra.mxu0 0.0
        %1157 = vmatpush.msra.mxu0 0.0
        %1158 = vmatpush.msra.mxu0 0.0
        %1159 = vmatpush.msra.mxu0 0.0
        %1160 = vmatpush.msra.mxu0 0.0
        %1161 = vmatpush.msra.mxu0 0.0
        %1162 = vmatpush.msra.mxu0 %v1142
        %1163 = vmatmul.f32.gmra.mxu0 %v1145
        %v1164 = vpop.f32.mrf.mxu0
        %v1165 = vadd.f32 0.0, %v1164
        %1166 = vdwg.mxu0
        %1168 = vrot.lane.b32.xlu0 %v870, 96
        %v1169 = vpop.permute.xlu0 %1168
        %v1172 = vsel %vm937, %v1139, 0
        %1174 = vmatpush.msra.mxu0 0.0
        %1175 = vmatpush.msra.mxu0 0.0
        %1176 = vmatpush.msra.mxu0 0.0
        %1177 = vmatpush.msra.mxu0 0.0
        %1178 = vmatpush.msra.mxu0 0.0
        %1179 = vmatpush.msra.mxu0 0.0
        %1180 = vmatpush.msra.mxu0 0.0
        %1181 = vmatpush.msra.mxu0 0.0
        %1182 = vmatpush.msra.mxu0 0.0
        %1183 = vmatpush.msra.mxu0 0.0
        %1184 = vmatpush.msra.mxu0 0.0
        %1185 = vmatpush.msra.mxu0 0.0
        %1186 = vmatpush.msra.mxu0 0.0
        %1187 = vmatpush.msra.mxu0 0.0
        %1188 = vmatpush.msra.mxu0 0.0
        %1189 = vmatpush.msra.mxu0 %v1169
        %1190 = vmatmul.f32.gmra.mxu0 %v1172
        %v1191 = vpop.f32.mrf.mxu0
        %v1192 = vadd.f32 0.0, %v1191
        %1193 = vdwg.mxu0
        %1196 = vrot.lane.b32.xlu0 %v1165, 32
        %v1197 = vpop.permute.xlu0 %1196
        %1198 = vrot.lane.b32.xlu0 %v1192, 32
        %v1199 = vpop.permute.xlu0 %1198
        %vm1202 = vcmask 523520
        %1203 = vst.msk [vmem:[#allocation2] sm:$0xff] %vm1202, %v1197
        %1204 = vst.msk [vmem:[#allocation2 + $0x8] sm:$0xff] %vm1202, %v1199
        %1205 = vrot.lane.b32.xlu0 %v784, 64
        %v1206 = vpop.permute.xlu0 %1205
        %1207 = vrot.lane.b32.xlu0 %v824, 64
        %v1208 = vpop.permute.xlu0 %1207
        %v1209 = vsel %vm876, %v1206, 0
        %v1211 = vsel %vm876, %v1208, 0
        %1213 = vmatpush.xpose.msra.mxu0 0.0
        %1214 = vmatpush.xpose.msra.mxu0 0.0
        %1215 = vmatpush.xpose.msra.mxu0 0.0
        %1216 = vmatpush.xpose.msra.mxu0 0.0
        %1217 = vmatpush.xpose.msra.mxu0 0.0
        %1218 = vmatpush.xpose.msra.mxu0 0.0
        %1219 = vmatpush.xpose.msra.mxu0 0.0
        %1220 = vmatpush.xpose.msra.mxu0 0.0
        %1221 = vmatpush.xpose.msra.mxu0 0.0
        %1222 = vmatpush.xpose.msra.mxu0 0.0
        %1223 = vmatpush.xpose.msra.mxu0 0.0
        %1224 = vmatpush.xpose.msra.mxu0 0.0
        %1225 = vmatpush.xpose.msra.mxu0 0.0
        %1226 = vmatpush.xpose.msra.mxu0 0.0
        %1227 = vmatpush.xpose.msra.mxu0 0.0
        %1228 = vmatpush.xpose.msra.mxu0 %v1211
        %1229 = vmatmul.f32.gmra.mxu0 %v1209
        %v1230 = vpop.f32.mrf.mxu0
        %v1231 = vadd.f32 0.0, %v1230
        %1232 = vdwg.mxu0
        %1233 = vrot.lane.b32.xlu0 %v785, 64
        %v1234 = vpop.permute.xlu0 %1233
        %1235 = vrot.lane.b32.xlu0 %v827, 64
        %v1236 = vpop.permute.xlu0 %1235
        %v1237 = vsel %vm876, %v1234, 0
        %v1239 = vsel %vm876, %v1236, 0
        %1241 = vmatpush.xpose.msra.mxu0 0.0
        %1242 = vmatpush.xpose.msra.mxu0 0.0
        %1243 = vmatpush.xpose.msra.mxu0 0.0
        %1244 = vmatpush.xpose.msra.mxu0 0.0
        %1245 = vmatpush.xpose.msra.mxu0 0.0
        %1246 = vmatpush.xpose.msra.mxu0 0.0
        %1247 = vmatpush.xpose.msra.mxu0 0.0
        %1248 = vmatpush.xpose.msra.mxu0 0.0
        %1249 = vmatpush.xpose.msra.mxu0 0.0
        %1250 = vmatpush.xpose.msra.mxu0 0.0
        %1251 = vmatpush.xpose.msra.mxu0 0.0
        %1252 = vmatpush.xpose.msra.mxu0 0.0
        %1253 = vmatpush.xpose.msra.mxu0 0.0
        %1254 = vmatpush.xpose.msra.mxu0 0.0
        %1255 = vmatpush.xpose.msra.mxu0 0.0
        %1256 = vmatpush.xpose.msra.mxu0 %v1239
        %1257 = vmatmul.f32.gmra.mxu0 %v1237
        %v1258 = vpop.f32.mrf.mxu0
        %v1259 = vadd.f32 0.0, %v1258
        %1260 = vdwg.mxu0
        %v1261 = vsel %vm933, -10000.0, %v1231
        %v1262 = vsel %vm934, -10000.0, %v1259
        %v1263 = vsel %vm937, %v1261, -inf
        %1264 = vmax.xlane.f32.xlu0 %v1263
        %v1265 = vpop.xlane.xlu0 %1264
        %v1266 = vsel %vm937, %v1262, -inf
        %1267 = vmax.xlane.f32.xlu0 %v1266
        %v1268 = vpop.xlane.xlu0 %1267
        %v1269 = vsub.f32 %v1261, %v1265
        %v1270 = vsub.f32 %v1262, %v1268
        %v1271 = vmul.f32 %v1269, 1.442695
        %v1272 = vpow.pop %v1271
        %v1273 = vmul.f32 %v1270, 1.442695
        %v1274 = vpow.pop %v1273
        %v1275 = vsel %vm937, %v1272, 0.0
        %1276 = vadd.xlane.f32.xlu0 %v1275
        %v1277 = vpop.xlane.xlu0 %1276
        %v1278 = vsel %vm937, %v1274, 0.0
        %1279 = vadd.xlane.f32.xlu0 %v1278
        %v1280 = vpop.xlane.xlu0 %1279
        %v1281 = vrcp.pop %v1277
        %v1282 = vmul.f32 %v1277, %v1281
        %v1283 = vsub.f32 1.0, %v1282
        %v1284 = vmul.f32 %v1281, %v1283
        %v1285 = vadd.f32 %v1281, %v1284
        %vm1286 = vweird.f32 %v1277
        %vm1287 = vweird.f32 %v1281
        %vm1288 = vmor %vm1286, %vm1287
        %v1289 = vsel %vm1288, %v1281, %v1285
        %v1290 = vand.u32 2147483647, %v1277
        %vm1291 = vcmp.eq.f32.partialorder %v1290, 8.507059e+37
        %v1292 = vand.u32 %v1277, 2147483648
        %v1293 = vor.u32 1.1754944e-38, %v1292
        %v1294 = vsel %vm1291, %v1293, %v1289
        %v1295 = vrcp.pop %v1280
        %v1296 = vmul.f32 %v1280, %v1295
        %v1297 = vsub.f32 1.0, %v1296
        %v1298 = vmul.f32 %v1295, %v1297
        %v1299 = vadd.f32 %v1295, %v1298
        %vm1300 = vweird.f32 %v1280
        %vm1301 = vweird.f32 %v1295
        %vm1302 = vmor %vm1300, %vm1301
        %v1303 = vsel %vm1302, %v1295, %v1299
        %v1304 = vand.u32 2147483647, %v1280
        %vm1305 = vcmp.eq.f32.partialorder %v1304, 8.507059e+37
        %v1306 = vand.u32 %v1280, 2147483648
        %v1307 = vor.u32 1.1754944e-38, %v1306
        %v1308 = vsel %vm1305, %v1307, %v1303
        %v1309 = vmul.f32 %v1272, %v1294
        %v1310 = vmul.f32 %v1274, %v1308
        %1311 = vrot.lane.b32.xlu0 %v867, 64
        %v1312 = vpop.permute.xlu0 %1311
        %v1315 = vsel %vm937, %v1309, 0
        %1317 = vmatpush.msra.mxu0 0.0
        %1318 = vmatpush.msra.mxu0 0.0
        %1319 = vmatpush.msra.mxu0 0.0
        %1320 = vmatpush.msra.mxu0 0.0
        %1321 = vmatpush.msra.mxu0 0.0
        %1322 = vmatpush.msra.mxu0 0.0
        %1323 = vmatpush.msra.mxu0 0.0
        %1324 = vmatpush.msra.mxu0 0.0
        %1325 = vmatpush.msra.mxu0 0.0
        %1326 = vmatpush.msra.mxu0 0.0
        %1327 = vmatpush.msra.mxu0 0.0
        %1328 = vmatpush.msra.mxu0 0.0
        %1329 = vmatpush.msra.mxu0 0.0
        %1330 = vmatpush.msra.mxu0 0.0
        %1331 = vmatpush.msra.mxu0 0.0
        %1332 = vmatpush.msra.mxu0 %v1312
        %1333 = vmatmul.f32.gmra.mxu0 %v1315
        %v1334 = vpop.f32.mrf.mxu0
        %v1335 = vadd.f32 0.0, %v1334
        %1336 = vdwg.mxu0
        %1337 = vrot.lane.b32.xlu0 %v870, 64
        %v1338 = vpop.permute.xlu0 %1337
        %v1341 = vsel %vm937, %v1310, 0
        %1343 = vmatpush.msra.mxu0 0.0
        %1344 = vmatpush.msra.mxu0 0.0
        %1345 = vmatpush.msra.mxu0 0.0
        %1346 = vmatpush.msra.mxu0 0.0
        %1347 = vmatpush.msra.mxu0 0.0
        %1348 = vmatpush.msra.mxu0 0.0
        %1349 = vmatpush.msra.mxu0 0.0
        %1350 = vmatpush.msra.mxu0 0.0
        %1351 = vmatpush.msra.mxu0 0.0
        %1352 = vmatpush.msra.mxu0 0.0
        %1353 = vmatpush.msra.mxu0 0.0
        %1354 = vmatpush.msra.mxu0 0.0
        %1355 = vmatpush.msra.mxu0 0.0
        %1356 = vmatpush.msra.mxu0 0.0
        %1357 = vmatpush.msra.mxu0 0.0
        %1358 = vmatpush.msra.mxu0 %v1338
        %1359 = vmatmul.f32.gmra.mxu0 %v1341
        %v1360 = vpop.f32.mrf.mxu0
        %v1361 = vadd.f32 0.0, %v1360
        %1362 = vdwg.mxu0
        %1365 = vrot.lane.b32.xlu0 %v1335, 64
        %v1366 = vpop.permute.xlu0 %1365
        %1367 = vrot.lane.b32.xlu0 %v1361, 64
        %v1368 = vpop.permute.xlu0 %1367
        %vm1371 = vcmask 785920
        %1372 = vst.msk [vmem:[#allocation2] sm:$0xff] %vm1371, %v1366
        %1373 = vst.msk [vmem:[#allocation2 + $0x8] sm:$0xff] %vm1371, %v1368
        %1374 = vrot.lane.b32.xlu0 %v784, 32
        %v1375 = vpop.permute.xlu0 %1374
        %1376 = vrot.lane.b32.xlu0 %v824, 32
        %v1377 = vpop.permute.xlu0 %1376
        %v1378 = vsel %vm876, %v1375, 0
        %v1380 = vsel %vm876, %v1377, 0
        %1382 = vmatpush.xpose.msra.mxu0 0.0
        %1383 = vmatpush.xpose.msra.mxu0 0.0
        %1384 = vmatpush.xpose.msra.mxu0 0.0
        %1385 = vmatpush.xpose.msra.mxu0 0.0
        %1386 = vmatpush.xpose.msra.mxu0 0.0
        %1387 = vmatpush.xpose.msra.mxu0 0.0
        %1388 = vmatpush.xpose.msra.mxu0 0.0
        %1389 = vmatpush.xpose.msra.mxu0 0.0
        %1390 = vmatpush.xpose.msra.mxu0 0.0
        %1391 = vmatpush.xpose.msra.mxu0 0.0
        %1392 = vmatpush.xpose.msra.mxu0 0.0
        %1393 = vmatpush.xpose.msra.mxu0 0.0
        %1394 = vmatpush.xpose.msra.mxu0 0.0
        %1395 = vmatpush.xpose.msra.mxu0 0.0
        %1396 = vmatpush.xpose.msra.mxu0 0.0
        %1397 = vmatpush.xpose.msra.mxu0 %v1380
        %1398 = vmatmul.f32.gmra.mxu0 %v1378
        %v1399 = vpop.f32.mrf.mxu0
        %v1400 = vadd.f32 0.0, %v1399
        %1401 = vdwg.mxu0
        %1402 = vrot.lane.b32.xlu0 %v785, 32
        %v1403 = vpop.permute.xlu0 %1402
        %1404 = vrot.lane.b32.xlu0 %v827, 32
        %v1405 = vpop.permute.xlu0 %1404
        %v1406 = vsel %vm876, %v1403, 0
        %v1408 = vsel %vm876, %v1405, 0
        %1410 = vmatpush.xpose.msra.mxu0 0.0
        %1411 = vmatpush.xpose.msra.mxu0 0.0
        %1412 = vmatpush.xpose.msra.mxu0 0.0
        %1413 = vmatpush.xpose.msra.mxu0 0.0
        %1414 = vmatpush.xpose.msra.mxu0 0.0
        %1415 = vmatpush.xpose.msra.mxu0 0.0
        %1416 = vmatpush.xpose.msra.mxu0 0.0
        %1417 = vmatpush.xpose.msra.mxu0 0.0
        %1418 = vmatpush.xpose.msra.mxu0 0.0
        %1419 = vmatpush.xpose.msra.mxu0 0.0
        %1420 = vmatpush.xpose.msra.mxu0 0.0
        %1421 = vmatpush.xpose.msra.mxu0 0.0
        %1422 = vmatpush.xpose.msra.mxu0 0.0
        %1423 = vmatpush.xpose.msra.mxu0 0.0
        %1424 = vmatpush.xpose.msra.mxu0 0.0
        %1425 = vmatpush.xpose.msra.mxu0 %v1408
        %1426 = vmatmul.f32.gmra.mxu0 %v1406
        %v1427 = vpop.f32.mrf.mxu0
        %v1428 = vadd.f32 0.0, %v1427
        %1429 = vdwg.mxu0
        %v1430 = vsel %vm933, -10000.0, %v1400
        %v1431 = vsel %vm934, -10000.0, %v1428
        %v1432 = vsel %vm937, %v1430, -inf
        %1433 = vmax.xlane.f32.xlu0 %v1432
        %v1434 = vpop.xlane.xlu0 %1433
        %v1435 = vsel %vm937, %v1431, -inf
        %1436 = vmax.xlane.f32.xlu0 %v1435
        %v1437 = vpop.xlane.xlu0 %1436
        %v1438 = vsub.f32 %v1430, %v1434
        %v1439 = vsub.f32 %v1431, %v1437
        %v1440 = vmul.f32 %v1438, 1.442695
        %v1441 = vpow.pop %v1440
        %v1442 = vmul.f32 %v1439, 1.442695
        %v1443 = vpow.pop %v1442
        %v1444 = vsel %vm937, %v1441, 0.0
        %1445 = vadd.xlane.f32.xlu0 %v1444
        %v1446 = vpop.xlane.xlu0 %1445
        %v1447 = vsel %vm937, %v1443, 0.0
        %1448 = vadd.xlane.f32.xlu0 %v1447
        %v1449 = vpop.xlane.xlu0 %1448
        %v1450 = vrcp.pop %v1446
        %v1451 = vmul.f32 %v1446, %v1450
        %v1452 = vsub.f32 1.0, %v1451
        %v1453 = vmul.f32 %v1450, %v1452
        %v1454 = vadd.f32 %v1450, %v1453
        %vm1455 = vweird.f32 %v1446
        %vm1456 = vweird.f32 %v1450
        %vm1457 = vmor %vm1455, %vm1456
        %v1458 = vsel %vm1457, %v1450, %v1454
        %v1459 = vand.u32 2147483647, %v1446
        %vm1460 = vcmp.eq.f32.partialorder %v1459, 8.507059e+37
        %v1461 = vand.u32 %v1446, 2147483648
        %v1462 = vor.u32 1.1754944e-38, %v1461
        %v1463 = vsel %vm1460, %v1462, %v1458
        %v1464 = vrcp.pop %v1449
        %v1465 = vmul.f32 %v1449, %v1464
        %v1466 = vsub.f32 1.0, %v1465
        %v1467 = vmul.f32 %v1464, %v1466
        %v1468 = vadd.f32 %v1464, %v1467
        %vm1469 = vweird.f32 %v1449
        %vm1470 = vweird.f32 %v1464
        %vm1471 = vmor %vm1469, %vm1470
        %v1472 = vsel %vm1471, %v1464, %v1468
        %v1473 = vand.u32 2147483647, %v1449
        %vm1474 = vcmp.eq.f32.partialorder %v1473, 8.507059e+37
        %v1475 = vand.u32 %v1449, 2147483648
        %v1476 = vor.u32 1.1754944e-38, %v1475
        %v1477 = vsel %vm1474, %v1476, %v1472
        %v1478 = vmul.f32 %v1441, %v1463
        %v1479 = vmul.f32 %v1443, %v1477
        %1480 = vrot.lane.b32.xlu0 %v867, 32
        %v1481 = vpop.permute.xlu0 %1480
        %v1484 = vsel %vm937, %v1478, 0
        %1486 = vmatpush.msra.mxu0 0.0
        %1487 = vmatpush.msra.mxu0 0.0
        %1488 = vmatpush.msra.mxu0 0.0
        %1489 = vmatpush.msra.mxu0 0.0
        %1490 = vmatpush.msra.mxu0 0.0
        %1491 = vmatpush.msra.mxu0 0.0
        %1492 = vmatpush.msra.mxu0 0.0
        %1493 = vmatpush.msra.mxu0 0.0
        %1494 = vmatpush.msra.mxu0 0.0
        %1495 = vmatpush.msra.mxu0 0.0
        %1496 = vmatpush.msra.mxu0 0.0
        %1497 = vmatpush.msra.mxu0 0.0
        %1498 = vmatpush.msra.mxu0 0.0
        %1499 = vmatpush.msra.mxu0 0.0
        %1500 = vmatpush.msra.mxu0 0.0
        %1501 = vmatpush.msra.mxu0 %v1481
        %1502 = vmatmul.f32.gmra.mxu0 %v1484
        %v1503 = vpop.f32.mrf.mxu0
        %v1504 = vadd.f32 0.0, %v1503
        %1505 = vdwg.mxu0
        %1506 = vrot.lane.b32.xlu0 %v870, 32
        %v1507 = vpop.permute.xlu0 %1506
        %v1510 = vsel %vm937, %v1479, 0
        %1512 = vmatpush.msra.mxu0 0.0
        %1513 = vmatpush.msra.mxu0 0.0
        %1514 = vmatpush.msra.mxu0 0.0
        %1515 = vmatpush.msra.mxu0 0.0
        %1516 = vmatpush.msra.mxu0 0.0
        %1517 = vmatpush.msra.mxu0 0.0
        %1518 = vmatpush.msra.mxu0 0.0
        %1519 = vmatpush.msra.mxu0 0.0
        %1520 = vmatpush.msra.mxu0 0.0
        %1521 = vmatpush.msra.mxu0 0.0
        %1522 = vmatpush.msra.mxu0 0.0
        %1523 = vmatpush.msra.mxu0 0.0
        %1524 = vmatpush.msra.mxu0 0.0
        %1525 = vmatpush.msra.mxu0 0.0
        %1526 = vmatpush.msra.mxu0 0.0
        %1527 = vmatpush.msra.mxu0 %v1507
        %1528 = vmatmul.f32.gmra.mxu0 %v1510
        %v1529 = vpop.f32.mrf.mxu0
        %v1530 = vadd.f32 0.0, %v1529
        %1531 = vdwg.mxu0
        %1534 = vrot.lane.b32.xlu0 %v1504, 96
        %v1535 = vpop.permute.xlu0 %1534
        %1536 = vrot.lane.b32.xlu0 %v1530, 96
        %v1537 = vpop.permute.xlu0 %1536
        %vm1540 = vcmask 1048320
        %1541 = vst.msk [vmem:[#allocation2] sm:$0xff] %vm1540, %v1535
        %1542 = vst.msk [vmem:[#allocation2 + $0x8] sm:$0xff] %vm1540, %v1537
        %v1543 = vld [vmem:[#allocation2] sm:$0xff]
        %v1544 = vld [vmem:[#allocation2 + $0x8] sm:$0xff]
        %v1545 = vld [vmem:[#allocation12] sm:$0xff]
        %v1546 = vld [vmem:[#allocation12 + $0x8] sm:$0xff]
        %v1547 = vld [vmem:[#allocation12 + $0x10] sm:$0xff]
        %v1548 = vld [vmem:[#allocation12 + $0x18] sm:$0xff]
        %v1549 = vld [vmem:[#allocation12 + $0x20] sm:$0xff]
        %v1550 = vld [vmem:[#allocation12 + $0x28] sm:$0xff]
        %v1551 = vld [vmem:[#allocation12 + $0x30] sm:$0xff]
        %v1552 = vld [vmem:[#allocation12 + $0x38] sm:$0xff]
        %v1553 = vld [vmem:[#allocation12 + $0x40] sm:$0xff]
        %v1554 = vld [vmem:[#allocation12 + $0x48] sm:$0xff]
        %v1555 = vld [vmem:[#allocation12 + $0x50] sm:$0xff]
        %v1556 = vld [vmem:[#allocation12 + $0x58] sm:$0xff]
        %v1557 = vld [vmem:[#allocation12 + $0x60] sm:$0xff]
        %v1558 = vld [vmem:[#allocation12 + $0x68] sm:$0xff]
        %v1559 = vld [vmem:[#allocation12 + $0x70] sm:$0xff]
        %v1560 = vld [vmem:[#allocation12 + $0x78] sm:$0xff]
        %v1561 = vld [vmem:[%s9] sm:$0x1]
        %v1563 = vperm.slane %v1561, 0
        %1565 = vmatpush.msra.mxu0 %v1560
        %1566 = vmatpush.msra.mxu0 %v1559
        %1567 = vmatpush.msra.mxu0 %v1558
        %1568 = vmatpush.msra.mxu0 %v1557
        %1569 = vmatpush.msra.mxu0 %v1556
        %1570 = vmatpush.msra.mxu0 %v1555
        %1571 = vmatpush.msra.mxu0 %v1554
        %1572 = vmatpush.msra.mxu0 %v1553
        %1573 = vmatpush.msra.mxu0 %v1552
        %1574 = vmatpush.msra.mxu0 %v1551
        %1575 = vmatpush.msra.mxu0 %v1550
        %1576 = vmatpush.msra.mxu0 %v1549
        %1577 = vmatpush.msra.mxu0 %v1548
        %1578 = vmatpush.msra.mxu0 %v1547
        %1579 = vmatpush.msra.mxu0 %v1546
        %1580 = vmatpush.msra.mxu0 %v1545
        %1581 = vmatmul.f32.gmra.mxu0 %v1543
        %v1582 = vpop.f32.mrf.mxu0
        %v1583 = vadd.f32 %v1563, %v1582
        %1584 = vmatmul.f32.gmra.mxu0 %v1544
        %v1585 = vpop.f32.mrf.mxu0
        %v1586 = vadd.f32 %v1563, %v1585
        %1587 = vdwg.mxu0
        %v1588 = vadd.f32 %v739, %v1583
        %v1589 = vadd.f32 %v740, %v1586
        %1590 = vadd.xlane.f32.xlu0 %v1588
        %v1591 = vpop.xlane.xlu0 %1590
        %1592 = vadd.xlane.f32.xlu0 %v1589
        %v1593 = vpop.xlane.xlu0 %1592
        %v1594 = vrcp.pop 128.0
        %v1595 = vmul.f32 128.0, %v1594
        %v1596 = vsub.f32 1.0, %v1595
        %v1597 = vmul.f32 %v1594, %v1596
        %v1598 = vadd.f32 %v1594, %v1597
        %vm1599 = vweird.f32 %v1594
        %v1600 = vsel %vm1599, %v1594, %v1598
        %v1601 = vmul.f32 %v1591, %v1600
        %v1602 = vmul.f32 %v1593, %v1600
        %v1603 = vsub.f32 %v1588, %v1601
        %v1604 = vsub.f32 %v1589, %v1602
        %v1605 = vmul.f32 %v1603, %v1603
        %v1606 = vmul.f32 %v1604, %v1604
        %1607 = vadd.xlane.f32.xlu0 %v1605
        %v1608 = vpop.xlane.xlu0 %1607
        %1609 = vadd.xlane.f32.xlu0 %v1606
        %v1610 = vpop.xlane.xlu0 %1609
        %v1611 = vmul.f32 %v1608, %v1600
        %v1612 = vmul.f32 %v1610, %v1600
        %v1613 = vld [vmem:[%s10] sm:$0x1]
        %v1615 = vperm.slane %v1613, 0
        %v1617 = vmul.f32 %v1615, %v1603
        %v1618 = vmul.f32 %v1615, %v1604
        %v1619 = vadd.f32 %v1611, 1e-12
        %v1620 = vadd.f32 %v1612, 1e-12
        %v1621 = vrsqrt.pop %v1619
        %v1622 = vmul.f32 %v1621, %v1619
        %v1623 = vmul.f32 %v1622, %v1621
        %v1624 = vmul.f32 0.5, %v1623
        %v1625 = vsub.f32 1.5, %v1624
        %v1626 = vmul.f32 %v1621, %v1625
        %v1627 = vmul.f32 %v1619, %v1626
        %vm1628 = vcmp.eq.f32.partialorder %v1619, inf
        %v1629 = vsel %vm1628, %v1619, %v1627
        %vm1630 = vcmp.eq.f32.partialorder %v1619, 0.0
        %v1631 = vand.u32 %v1619, 2147483648
        %v1632 = vsel %vm1630, %v1631, %v1629
        %v1633 = vrsqrt.pop %v1620
        %v1634 = vmul.f32 %v1633, %v1620
        %v1635 = vmul.f32 %v1634, %v1633
        %v1636 = vmul.f32 0.5, %v1635
        %v1637 = vsub.f32 1.5, %v1636
        %v1638 = vmul.f32 %v1633, %v1637
        %v1639 = vmul.f32 %v1620, %v1638
        %vm1640 = vcmp.eq.f32.partialorder %v1620, inf
        %v1641 = vsel %vm1640, %v1620, %v1639
        %vm1642 = vcmp.eq.f32.partialorder %v1620, 0.0
        %v1643 = vand.u32 %v1620, 2147483648
        %v1644 = vsel %vm1642, %v1643, %v1641
        %v1645 = vrcp.pop %v1632
        %v1646 = vmul.f32 %v1632, %v1645
        %v1647 = vsub.f32 1.0, %v1646
        %v1648 = vmul.f32 %v1645, %v1647
        %v1649 = vadd.f32 %v1645, %v1648
        %vm1650 = vweird.f32 %v1632
        %vm1651 = vweird.f32 %v1645
        %vm1652 = vmor %vm1650, %vm1651
        %v1653 = vsel %vm1652, %v1645, %v1649
        %v1654 = vand.u32 2147483647, %v1632
        %vm1655 = vcmp.eq.f32.partialorder %v1654, 8.507059e+37
        %v1656 = vand.u32 %v1632, 2147483648
        %v1657 = vor.u32 1.1754944e-38, %v1656
        %v1658 = vsel %vm1655, %v1657, %v1653
        %v1659 = vmul.f32 %v1617, %v1658
        %v1660 = vrcp.pop %v1644
        %v1661 = vmul.f32 %v1644, %v1660
        %v1662 = vsub.f32 1.0, %v1661
        %v1663 = vmul.f32 %v1660, %v1662
        %v1664 = vadd.f32 %v1660, %v1663
        %vm1665 = vweird.f32 %v1644
        %vm1666 = vweird.f32 %v1660
        %vm1667 = vmor %vm1665, %vm1666
        %v1668 = vsel %vm1667, %v1660, %v1664
        %v1669 = vand.u32 2147483647, %v1644
        %vm1670 = vcmp.eq.f32.partialorder %v1669, 8.507059e+37
        %v1671 = vand.u32 %v1644, 2147483648
        %v1672 = vor.u32 1.1754944e-38, %v1671
        %v1673 = vsel %vm1670, %v1672, %v1668
        %v1674 = vmul.f32 %v1618, %v1673
        %v1675 = vld [vmem:[%s11] sm:$0x1]
        %v1677 = vperm.slane %v1675, 0
        %v1679 = vadd.f32 %v1659, %v1677
        %v1680 = vadd.f32 %v1674, %v1677
        %v1681 = vld [vmem:[#allocation14] sm:$0xff]
        %v1682 = vld [vmem:[#allocation14 + $0x8] sm:$0xff]
        %v1683 = vld [vmem:[#allocation14 + $0x10] sm:$0xff]
        %v1684 = vld [vmem:[#allocation14 + $0x18] sm:$0xff]
        %v1685 = vld [vmem:[#allocation14 + $0x20] sm:$0xff]
        %v1686 = vld [vmem:[#allocation14 + $0x28] sm:$0xff]
        %v1687 = vld [vmem:[#allocation14 + $0x30] sm:$0xff]
        %v1688 = vld [vmem:[#allocation14 + $0x38] sm:$0xff]
        %v1689 = vld [vmem:[#allocation14 + $0x40] sm:$0xff]
        %v1690 = vld [vmem:[#allocation14 + $0x48] sm:$0xff]
        %v1691 = vld [vmem:[#allocation14 + $0x50] sm:$0xff]
        %v1692 = vld [vmem:[#allocation14 + $0x58] sm:$0xff]
        %v1693 = vld [vmem:[#allocation14 + $0x60] sm:$0xff]
        %v1694 = vld [vmem:[#allocation14 + $0x68] sm:$0xff]
        %v1695 = vld [vmem:[#allocation14 + $0x70] sm:$0xff]
        %v1696 = vld [vmem:[#allocation14 + $0x78] sm:$0xff]
        %v1697 = vld [vmem:[#allocation14 + $0x80] sm:$0xff]
        %v1698 = vld [vmem:[#allocation14 + $0x88] sm:$0xff]
        %v1699 = vld [vmem:[#allocation14 + $0x90] sm:$0xff]
        %v1700 = vld [vmem:[#allocation14 + $0x98] sm:$0xff]
        %v1701 = vld [vmem:[#allocation14 + $0xa0] sm:$0xff]
        %v1702 = vld [vmem:[#allocation14 + $0xa8] sm:$0xff]
        %v1703 = vld [vmem:[#allocation14 + $0xb0] sm:$0xff]
        %v1704 = vld [vmem:[#allocation14 + $0xb8] sm:$0xff]
        %v1705 = vld [vmem:[#allocation14 + $0xc0] sm:$0xff]
        %v1706 = vld [vmem:[#allocation14 + $0xc8] sm:$0xff]
        %v1707 = vld [vmem:[#allocation14 + $0xd0] sm:$0xff]
        %v1708 = vld [vmem:[#allocation14 + $0xd8] sm:$0xff]
        %v1709 = vld [vmem:[#allocation14 + $0xe0] sm:$0xff]
        %v1710 = vld [vmem:[#allocation14 + $0xe8] sm:$0xff]
        %v1711 = vld [vmem:[#allocation14 + $0xf0] sm:$0xff]
        %v1712 = vld [vmem:[#allocation14 + $0xf8] sm:$0xff]
        %v1713 = vld [vmem:[%s13] sm:$0x3]
        %v1715 = vperm.slane %v1713, 0
        %v1716 = vperm.slane %v1713, 1
        %1719 = vmatpush.msra.mxu0 %v1711
        %1720 = vmatpush.msra.mxu0 %v1709
        %1721 = vmatpush.msra.mxu0 %v1707
        %1722 = vmatpush.msra.mxu0 %v1705
        %1723 = vmatpush.msra.mxu0 %v1703
        %1724 = vmatpush.msra.mxu0 %v1701
        %1725 = vmatpush.msra.mxu0 %v1699
        %1726 = vmatpush.msra.mxu0 %v1697
        %1727 = vmatpush.msra.mxu0 %v1695
        %1728 = vmatpush.msra.mxu0 %v1693
        %1729 = vmatpush.msra.mxu0 %v1691
        %1730 = vmatpush.msra.mxu0 %v1689
        %1731 = vmatpush.msra.mxu0 %v1687
        %1732 = vmatpush.msra.mxu0 %v1685
        %1733 = vmatpush.msra.mxu0 %v1683
        %1734 = vmatpush.msra.mxu0 %v1681
        %1735 = vmatmul.f32.gmra.mxu0 %v1679
        %v1736 = vpop.f32.mrf.mxu0
        %v1737 = vadd.f32 %v1715, %v1736
        %1738 = vmatmul.f32.gmra.mxu0 %v1680
        %v1739 = vpop.f32.mrf.mxu0
        %v1740 = vadd.f32 %v1715, %v1739
        %1741 = vdwg.mxu0
        %1742 = vmatpush.msra.mxu0 %v1712
        %1743 = vmatpush.msra.mxu0 %v1710
        %1744 = vmatpush.msra.mxu0 %v1708
        %1745 = vmatpush.msra.mxu0 %v1706
        %1746 = vmatpush.msra.mxu0 %v1704
        %1747 = vmatpush.msra.mxu0 %v1702
        %1748 = vmatpush.msra.mxu0 %v1700
        %1749 = vmatpush.msra.mxu0 %v1698
        %1750 = vmatpush.msra.mxu0 %v1696
        %1751 = vmatpush.msra.mxu0 %v1694
        %1752 = vmatpush.msra.mxu0 %v1692
        %1753 = vmatpush.msra.mxu0 %v1690
        %1754 = vmatpush.msra.mxu0 %v1688
        %1755 = vmatpush.msra.mxu0 %v1686
        %1756 = vmatpush.msra.mxu0 %v1684
        %1757 = vmatpush.msra.mxu0 %v1682
        %1758 = vmatmul.f32.gmra.mxu0 %v1679
        %v1759 = vpop.f32.mrf.mxu0
        %v1760 = vadd.f32 %v1716, %v1759
        %1761 = vmatmul.f32.gmra.mxu0 %v1680
        %v1762 = vpop.f32.mrf.mxu0
        %v1763 = vadd.f32 %v1716, %v1762
        %1764 = vdwg.mxu0
        %v1765 = vmax.f32 %v1737, 0.0
        %v1766 = vmax.f32 %v1760, 0.0
        %v1767 = vmax.f32 %v1740, 0.0
        %v1768 = vmax.f32 %v1763, 0.0
        %v1769 = vld [vmem:[#allocation15] sm:$0xff]
        %v1770 = vld [vmem:[#allocation15 + $0x8] sm:$0xff]
        %v1771 = vld [vmem:[#allocation15 + $0x10] sm:$0xff]
        %v1772 = vld [vmem:[#allocation15 + $0x18] sm:$0xff]
        %v1773 = vld [vmem:[#allocation15 + $0x20] sm:$0xff]
        %v1774 = vld [vmem:[#allocation15 + $0x28] sm:$0xff]
        %v1775 = vld [vmem:[#allocation15 + $0x30] sm:$0xff]
        %v1776 = vld [vmem:[#allocation15 + $0x38] sm:$0xff]
        %v1777 = vld [vmem:[#allocation15 + $0x40] sm:$0xff]
        %v1778 = vld [vmem:[#allocation15 + $0x48] sm:$0xff]
        %v1779 = vld [vmem:[#allocation15 + $0x50] sm:$0xff]
        %v1780 = vld [vmem:[#allocation15 + $0x58] sm:$0xff]
        %v1781 = vld [vmem:[#allocation15 + $0x60] sm:$0xff]
        %v1782 = vld [vmem:[#allocation15 + $0x68] sm:$0xff]
        %v1783 = vld [vmem:[#allocation15 + $0x70] sm:$0xff]
        %v1784 = vld [vmem:[#allocation15 + $0x78] sm:$0xff]
        %v1785 = vld [vmem:[#allocation15 + $0x80] sm:$0xff]
        %v1786 = vld [vmem:[#allocation15 + $0x88] sm:$0xff]
        %v1787 = vld [vmem:[#allocation15 + $0x90] sm:$0xff]
        %v1788 = vld [vmem:[#allocation15 + $0x98] sm:$0xff]
        %v1789 = vld [vmem:[#allocation15 + $0xa0] sm:$0xff]
        %v1790 = vld [vmem:[#allocation15 + $0xa8] sm:$0xff]
        %v1791 = vld [vmem:[#allocation15 + $0xb0] sm:$0xff]
        %v1792 = vld [vmem:[#allocation15 + $0xb8] sm:$0xff]
        %v1793 = vld [vmem:[#allocation15 + $0xc0] sm:$0xff]
        %v1794 = vld [vmem:[#allocation15 + $0xc8] sm:$0xff]
        %v1795 = vld [vmem:[#allocation15 + $0xd0] sm:$0xff]
        %v1796 = vld [vmem:[#allocation15 + $0xd8] sm:$0xff]
        %v1797 = vld [vmem:[#allocation15 + $0xe0] sm:$0xff]
        %v1798 = vld [vmem:[#allocation15 + $0xe8] sm:$0xff]
        %v1799 = vld [vmem:[#allocation15 + $0xf0] sm:$0xff]
        %v1800 = vld [vmem:[#allocation15 + $0xf8] sm:$0xff]
        %v1801 = vld [vmem:[%s15] sm:$0x1]
        %v1803 = vperm.slane %v1801, 0
        %1805 = vmatpush.msra.mxu0 %v1784
        %1806 = vmatpush.msra.mxu0 %v1783
        %1807 = vmatpush.msra.mxu0 %v1782
        %1808 = vmatpush.msra.mxu0 %v1781
        %1809 = vmatpush.msra.mxu0 %v1780
        %1810 = vmatpush.msra.mxu0 %v1779
        %1811 = vmatpush.msra.mxu0 %v1778
        %1812 = vmatpush.msra.mxu0 %v1777
        %1813 = vmatpush.msra.mxu0 %v1776
        %1814 = vmatpush.msra.mxu0 %v1775
        %1815 = vmatpush.msra.mxu0 %v1774
        %1816 = vmatpush.msra.mxu0 %v1773
        %1817 = vmatpush.msra.mxu0 %v1772
        %1818 = vmatpush.msra.mxu0 %v1771
        %1819 = vmatpush.msra.mxu0 %v1770
        %1820 = vmatpush.msra.mxu0 %v1769
        %1821 = vmatmul.f32.gmra.mxu0 %v1765
        %v1822 = vpop.f32.mrf.mxu0
        %v1823 = vadd.f32 %v1803, %v1822
        %1824 = vmatmul.f32.gmra.mxu0 %v1767
        %v1825 = vpop.f32.mrf.mxu0
        %v1826 = vadd.f32 %v1803, %v1825
        %1827 = vdwg.mxu0
        %1828 = vmatpush.msra.mxu0 %v1800
        %1829 = vmatpush.msra.mxu0 %v1799
        %1830 = vmatpush.msra.mxu0 %v1798
        %1831 = vmatpush.msra.mxu0 %v1797
        %1832 = vmatpush.msra.mxu0 %v1796
        %1833 = vmatpush.msra.mxu0 %v1795
        %1834 = vmatpush.msra.mxu0 %v1794
        %1835 = vmatpush.msra.mxu0 %v1793
        %1836 = vmatpush.msra.mxu0 %v1792
        %1837 = vmatpush.msra.mxu0 %v1791
        %1838 = vmatpush.msra.mxu0 %v1790
        %1839 = vmatpush.msra.mxu0 %v1789
        %1840 = vmatpush.msra.mxu0 %v1788
        %1841 = vmatpush.msra.mxu0 %v1787
        %1842 = vmatpush.msra.mxu0 %v1786
        %1843 = vmatpush.msra.mxu0 %v1785
        %1844 = vmatmul.f32.gmra.mxu0 %v1766
        %v1845 = vpop.f32.mrf.mxu0
        %v1846 = vadd.f32 %v1823, %v1845
        %1847 = vmatmul.f32.gmra.mxu0 %v1768
        %v1848 = vpop.f32.mrf.mxu0
        %v1849 = vadd.f32 %v1826, %v1848
        %1850 = vdwg.mxu0
        %v1851 = vadd.f32 %v1679, %v1846
        %v1852 = vadd.f32 %v1680, %v1849
        %1853 = vadd.xlane.f32.xlu0 %v1851
        %v1854 = vpop.xlane.xlu0 %1853
        %1855 = vadd.xlane.f32.xlu0 %v1852
        %v1856 = vpop.xlane.xlu0 %1855
        %v1857 = vmul.f32 %v1854, %v1600
        %v1858 = vmul.f32 %v1856, %v1600
        %v1859 = vsub.f32 %v1851, %v1857
        %v1860 = vsub.f32 %v1852, %v1858
        %v1861 = vmul.f32 %v1859, %v1859
        %v1862 = vmul.f32 %v1860, %v1860
        %1863 = vadd.xlane.f32.xlu0 %v1861
        %v1864 = vpop.xlane.xlu0 %1863
        %1865 = vadd.xlane.f32.xlu0 %v1862
        %v1866 = vpop.xlane.xlu0 %1865
        %v1867 = vmul.f32 %v1864, %v1600
        %v1868 = vmul.f32 %v1866, %v1600
        %v1869 = vld [vmem:[%s16] sm:$0x1]
        %v1871 = vperm.slane %v1869, 0
        %v1873 = vmul.f32 %v1871, %v1859
        %v1874 = vmul.f32 %v1871, %v1860
        %v1875 = vadd.f32 %v1867, 1e-12
        %v1876 = vadd.f32 %v1868, 1e-12
        %v1877 = vrsqrt.pop %v1875
        %v1878 = vmul.f32 %v1877, %v1875
        %v1879 = vmul.f32 %v1878, %v1877
        %v1880 = vmul.f32 0.5, %v1879
        %v1881 = vsub.f32 1.5, %v1880
        %v1882 = vmul.f32 %v1877, %v1881
        %v1883 = vmul.f32 %v1875, %v1882
        %vm1884 = vcmp.eq.f32.partialorder %v1875, inf
        %v1885 = vsel %vm1884, %v1875, %v1883
        %vm1886 = vcmp.eq.f32.partialorder %v1875, 0.0
        %v1887 = vand.u32 %v1875, 2147483648
        %v1888 = vsel %vm1886, %v1887, %v1885
        %v1889 = vrsqrt.pop %v1876
        %v1890 = vmul.f32 %v1889, %v1876
        %v1891 = vmul.f32 %v1890, %v1889
        %v1892 = vmul.f32 0.5, %v1891
        %v1893 = vsub.f32 1.5, %v1892
        %v1894 = vmul.f32 %v1889, %v1893
        %v1895 = vmul.f32 %v1876, %v1894
        %vm1896 = vcmp.eq.f32.partialorder %v1876, inf
        %v1897 = vsel %vm1896, %v1876, %v1895
        %vm1898 = vcmp.eq.f32.partialorder %v1876, 0.0
        %v1899 = vand.u32 %v1876, 2147483648
        %v1900 = vsel %vm1898, %v1899, %v1897
        %v1901 = vrcp.pop %v1888
        %v1902 = vmul.f32 %v1888, %v1901
        %v1903 = vsub.f32 1.0, %v1902
        %v1904 = vmul.f32 %v1901, %v1903
        %v1905 = vadd.f32 %v1901, %v1904
        %vm1906 = vweird.f32 %v1888
        %vm1907 = vweird.f32 %v1901
        %vm1908 = vmor %vm1906, %vm1907
        %v1909 = vsel %vm1908, %v1901, %v1905
        %v1910 = vand.u32 2147483647, %v1888
        %vm1911 = vcmp.eq.f32.partialorder %v1910, 8.507059e+37
        %v1912 = vand.u32 %v1888, 2147483648
        %v1913 = vor.u32 1.1754944e-38, %v1912
        %v1914 = vsel %vm1911, %v1913, %v1909
        %v1915 = vmul.f32 %v1873, %v1914
        %v1916 = vrcp.pop %v1900
        %v1917 = vmul.f32 %v1900, %v1916
        %v1918 = vsub.f32 1.0, %v1917
        %v1919 = vmul.f32 %v1916, %v1918
        %v1920 = vadd.f32 %v1916, %v1919
        %vm1921 = vweird.f32 %v1900
        %vm1922 = vweird.f32 %v1916
        %vm1923 = vmor %vm1921, %vm1922
        %v1924 = vsel %vm1923, %v1916, %v1920
        %v1925 = vand.u32 2147483647, %v1900
        %vm1926 = vcmp.eq.f32.partialorder %v1925, 8.507059e+37
        %v1927 = vand.u32 %v1900, 2147483648
        %v1928 = vor.u32 1.1754944e-38, %v1927
        %v1929 = vsel %vm1926, %v1928, %v1924
        %v1930 = vmul.f32 %v1874, %v1929
        %v1931 = vld [vmem:[%s17] sm:$0x1]
        %v1933 = vperm.slane %v1931, 0
        %v1935 = vadd.f32 %v1915, %v1933
        %v1936 = vadd.f32 %v1930, %v1933
        %1937 = vst [vmem:[%s735] sm:$0xff] %v1935
        %1938 = vst [vmem:[%s735 + $0x8] sm:$0xff] %v1936
        %s1939 = sand.u32 %s437, 1
        %s1940 = scalar_lea.sflag [#allocation5], %s1939
        %s1941 = sand.u32 %s437, 1
        %s1942 = smul.addr %s1941, 16
        %s1943 = scalar_lea.vmem [#allocation17], %s1942
        // Predicated region
        $region125: #{tpu_custom_call.1} parent=91 // pred_check
          %p1944 = pneg %p447
        $region126: #{tpu_custom_call.1} parent=91 // pred_check_branch
          %1946 = sbr.rel (%p1944) target = $region128
        $region127: #{tpu_custom_call.1} parent=91 // pred_region
          %s1947 = smul.u32 2, %s41
          %1949 = vsyncadd %s1940, 0
          %s1950 = smul.addr %s1947, 8
          %s1951 = scalar_lea.hbm %s18, %s1950
          %s1952 = sshll.u32 %s1943, 4
          %s1953 = int_to_ptr.vmem [resolvable:$true] %s1952
          %s1954 = sshll.u32 %s1951, 4
          %s1955 = int_to_ptr.hbm [resolvable:$true] %s1954
          %1960 = dma.vmem_to_hbm [thread:$0]  %s1953, 256, %s1955, %s1940, 128, 128, 8
        $region128: #{tpu_custom_call.1} parent=91 // pred_fallthru
          _
      $region92: #{tpu_custom_call.1} parent=5 // pred_fallthru
        _
      %p1961 = scmp.le.s32.totalorder 2, %s36
      // Predicated region
      $region129: #{tpu_custom_call.1} parent=5 // pred_check
        %p1962 = pneg %p1961
      $region130: #{tpu_custom_call.1} parent=5 // pred_check_branch
        %1964 = sbr.rel (%p1962) target = $region132
      $region131: #{tpu_custom_call.1} parent=5 // pred_region
        %s1965 = ssub.s32 %s36, 2
        // Predicated region
        $region133: #{tpu_custom_call.1} parent=131 // pred_check
          %p1966 = pneg %p453
        $region134: #{tpu_custom_call.1} parent=131 // pred_check_branch
          %1968 = sbr.rel (%p1966) target = $region136
        $region135: #{tpu_custom_call.1} parent=131 // pred_region
          %s1969 = sand.u32 %s438, 1
          %s1970 = scalar_lea.sflag [#allocation5], %s1969
          %s1971 = sand.u32 %s438, 1
          %s1972 = smul.addr %s1971, 16
          %s1973 = scalar_lea.vmem [#allocation17], %s1972
          %1975 = dma.done %s1970, 256
        $region136: #{tpu_custom_call.1} parent=131 // pred_fallthru
          _
      $region132: #{tpu_custom_call.1} parent=5 // pred_fallthru
        _
    $region6: #{tpu_custom_call.1} parent=1 // loop_footer
      %s40 = sadd.s32 1, %s36
    $region7: #{tpu_custom_call.1} parent=1 // loop_footer_branch
      %35 = sbr.rel target = $region3
    $region8: #{tpu_custom_call.1} parent=1 // loop_exit
      _
    %1976 = vsyncpa [#allocation4], 1
    %s1977 = scalar_lea.sflag [#allocation4], 1
    %1978 = vsyncpa %s1977, 1
    %1979 = vsyncpa [#allocation7], 1
    %s1980 = scalar_lea.sflag [#allocation7], 1
    %1981 = vsyncpa %s1980, 1
    %1982 = vsyncpa [#allocation10], 1
    %1983 = vsyncpa [#allocation13], 1
    %1984 = vsyncpa [#allocation16], 1
    %1985 = vsyncpa [#allocation5], 1
    %s1986 = scalar_lea.sflag [#allocation5], 1
    %1987 = vsyncpa %s1986, 1

</llo_original>
